<compile_context>
chip_gen: v7x
topology: tpu7x:2x2x1
jax: 0.10.0
libtpu: 0.0.40
codegen_flags: <defaults>
</compile_context>

<pallas_src>
import jax
import jax.numpy as jnp
from jax.experimental import pallas as pl
from jax.experimental.pallas import tpu as pltpu


def _round_up(n, m):
    return ((n + m - 1) // m) * m


def _make_mlp_kernel(padded_out_dims, num_classes):
    """Build the fused-MLP kernel for the given (static) padded layer widths."""
    n_layers = len(padded_out_dims)          # 4 hidden + 1 output = 5
    offsets, off = [], 0
    for d in padded_out_dims:
        offsets.append(off)
        off += d

    def kernel(x_ref, *refs):
        w_refs = refs[:n_layers]
        b_ref = refs[n_layers]
        out_ref = refs[n_layers + 1]

        h = x_ref[...]                        # bf16 (TB, D) — already bf16 from wrapper
        # Hidden layers: relu(h @ w + c), downcast to bf16 once per layer.
        for li in range(n_layers - 1):
            n = padded_out_dims[li]
            c = b_ref[:, offsets[li]:offsets[li] + n]        # 128-aligned static slice
            acc = jnp.dot(h, w_refs[li][...],
                          preferred_element_type=jnp.float32) + c
            h = jnp.maximum(acc, 0.0).astype(jnp.bfloat16)
        # Output layer: keep logits in f32, write only the real class columns.
        n = padded_out_dims[-1]
        c = b_ref[:, offsets[-1]:offsets[-1] + n]
        logits = jnp.dot(h, w_refs[-1][...],
                         preferred_element_type=jnp.float32) + c
        out_ref[...] = logits[:, :num_classes].astype(out_ref.dtype)

    return kernel


def pack_params(raw_params, input_size, num_classes, eps=1e-5):
    """Fold BN into Linear, zero-pad lane dims to 128, cast weights to bf16,
    concatenate all folded biases into one (1, sum(padded)) f32 array.

    raw_params = (hidden_layers, (w_out, b_out)); each hidden layer is
    (w[in,out], b[1,out], gamma, beta, running_mean, running_var), with Linear
    weights already transposed from torch's (out,in) to (in,out).
    Returns (weights:list[bf16], bias_cat:f32, padded_out_dims:list[int]).
    """
    hidden, (w_out, b_out) = raw_params
    weights, biases, padded_out_dims = [], [], []
    prev, prev_pad = input_size, input_size          # x is NOT feature-padded
    for (w, b, gamma, beta, mean, var) in hidden:
        out_dim = w.shape[1]
        out_pad = _round_up(out_dim, 128)
        scale = gamma / jnp.sqrt(var + eps)          # BN fold, in f32
        w_f = w * scale                              # per-output-column scale
        c_f = (b - mean) * scale + beta              # folded bias
        w_p = jnp.zeros((prev_pad, out_pad), jnp.float32).at[:prev, :out_dim].set(w_f)
        c_p = jnp.zeros((1, out_pad), jnp.float32).at[:, :out_dim].set(c_f)
        weights.append(w_p.astype(jnp.bfloat16))
        biases.append(c_p)
        padded_out_dims.append(out_pad)
        prev, prev_pad = out_dim, out_pad
    cls_pad = _round_up(num_classes, 128)
    w_p = jnp.zeros((prev_pad, cls_pad), jnp.float32).at[:prev, :num_classes].set(w_out)
    c_p = jnp.zeros((1, cls_pad), jnp.float32).at[:, :num_classes].set(b_out)
    weights.append(w_p.astype(jnp.bfloat16))
    biases.append(c_p)
    padded_out_dims.append(cls_pad)
    bias_cat = jnp.concatenate(biases, axis=1)       # (1, 1152) for the demo shapes
    return weights, bias_cat, padded_out_dims


def ms_deep_learning_classifier_forward(x, packed, num_classes):
    """x: (B, C, H, W) float32; packed from pack_params. Returns (B, num_classes) f32."""
    weights, bias_cat, padded_out_dims = packed
    B = x.shape[0]
    x_flat = x.reshape(B, -1).astype(jnp.bfloat16)   # == torch x.view(B,-1); bf16 stream
    D = x_flat.shape[1]
    assert D == weights[0].shape[0], (D, weights[0].shape)

    # Batch tiling: small B -> single full-extent block (no pad, no slice);
    # large B -> 512-row tiles (weights stay resident, fewer grid steps).
    TB_CAP = 512
    if B <= TB_CAP:
        TB, B_pad, x_in = B, B, x_flat
    else:
        TB = TB_CAP
        B_pad = _round_up(B, TB)
        x_in = jnp.zeros((B_pad, D), jnp.bfloat16).at[:B].set(x_flat)

    grid = (B_pad // TB,)
    kernel = _make_mlp_kernel(padded_out_dims, num_classes)

    x_spec = pl.BlockSpec((TB, D), lambda i: (i, 0))
    # Weights/bias: full block, constant block index -> fetched once, VMEM-resident.
    w_specs = [pl.BlockSpec(w.shape, lambda i: (0, 0)) for w in weights]
    b_spec = pl.BlockSpec(bias_cat.shape, lambda i: (0, 0))
    out_spec = pl.BlockSpec((TB, num_classes), lambda i: (i, 0))

    # VMEM budget: double-buffered params + double-buffered x/out tiles +
    # widest intermediate (f32 accumulator + bf16 activation) + scratch headroom.
    param_bytes = (sum(int(w.size) * w.dtype.itemsize for w in weights)
                   + int(bias_cat.size) * bias_cat.dtype.itemsize)
    max_h = max(padded_out_dims)
    io_bytes = 2 * TB * D * 2 + 2 * TB * num_classes * 4
    inter_bytes = TB * max_h * (4 + 2)
    vmem_limit = int(2 * param_bytes + io_bytes + inter_bytes + 4 * 1024 * 1024)
    vmem_limit = max(vmem_limit, 16 * 1024 * 1024)

    out = pl.pallas_call(
        kernel,
        out_shape=jax.ShapeDtypeStruct((B_pad, num_classes), jnp.float32),
        grid=grid,
        in_specs=[x_spec] + w_specs + [b_spec],
        out_specs=out_spec,
        compiler_params=pltpu.CompilerParams(
            # Single grid step at small B (no cross-TC weight duplication on v7x);
            # at large B the parallel axis amortizes the duplicated weight DMA.
            dimension_semantics=("parallel",),
            vmem_limit_bytes=vmem_limit),
    )(x_in, *weights, bias_cat)
    return out if B_pad == B else out[:B]


def init_raw_params(input_size, hidden_sizes, num_classes, key):
    """Deterministic synthetic parameters matching the PyTorch module (eval mode)."""
    hidden = []
    prev = input_size
    for h in hidden_sizes:
        key, kw, kb, kg, kbe, krm, krv = jax.random.split(key, 7)
        bound = 1.0 / jnp.sqrt(prev)
        w = jax.random.uniform(kw, (prev, h), jnp.float32, -bound, bound)   # (in, out)
        b = jax.random.uniform(kb, (1, h), jnp.float32, -bound, bound)
        gamma = 1.0 + 0.1 * jax.random.normal(kg, (1, h), jnp.float32)
        beta = 0.1 * jax.random.normal(kbe, (1, h), jnp.float32)
        running_mean = 0.1 * jax.random.normal(krm, (1, h), jnp.float32)
        running_var = jnp.abs(1.0 + 0.1 * jax.random.normal(krv, (1, h), jnp.float32))
        hidden.append((w, b, gamma, beta, running_mean, running_var))
        prev = h
    key, kw, kb = jax.random.split(key, 3)
    bound = 1.0 / jnp.sqrt(prev)
    w_out = jax.random.uniform(kw, (prev, num_classes), jnp.float32, -bound, bound)
    b_out = jax.random.uniform(kb, (1, num_classes), jnp.float32, -bound, bound)
    return hidden, (w_out, b_out)


def reference_forward_f32(x, raw_params, eps=1e-5):
    """Pure-f32 JAX reference matching the PyTorch module in eval mode."""
    hidden, (w_out, b_out) = raw_params
    h = x.reshape(x.shape[0], -1)
    for (w, b, gamma, beta, mean, var) in hidden:
        y = h @ w + b
        y = (y - mean) / jnp.sqrt(var + eps) * gamma + beta
        h = jnp.maximum(y, 0.0)
    return h @ w_out + b_out


def reference_forward_packed(x, packed, num_classes):
    """JAX reference emulating the kernel's bf16-activation / bf16-weight /
    f32-accumulate numerics exactly."""
    weights, bias_cat, padded_out_dims = packed
    B = x.shape[0]
    h = x.reshape(B, -1).astype(jnp.bfloat16).astype(jnp.float32)
    off = 0
    y = None
    for li, w in enumerate(weights):
        n = padded_out_dims[li]
        c = bias_cat[:, off:off + n]
        off += n
        y = jnp.dot(h, w.astype(jnp.float32),
                    precision=jax.lax.Precision.HIGHEST) + c
        if li < len(weights) - 1:
            h = jnp.maximum(y, 0.0).astype(jnp.bfloat16).astype(jnp.float32)
    return y[:, :num_classes]


if __name__ == "__main__":
    # Small shapes consistent with the module's forward: NCHW input flattened.
    B, C, H, W = 2, 4, 16, 16
    input_size = C * H * W                 # 1024
    hidden_sizes = [512, 256, 128, 64]
    num_classes = 2                        # dropout=0.5 is identity in eval mode

    key = jax.random.PRNGKey(0)
    key, kx = jax.random.split(key)
    x = jax.random.normal(kx, (B, C, H, W), jnp.float32)

    raw_params = init_raw_params(input_size, hidden_sizes, num_classes, key)
    packed = pack_params(raw_params, input_size, num_classes)

    out = ms_deep_learning_classifier_forward(x, packed, num_classes)
    out = jax.block_until_ready(out)
    assert out.shape == (B, num_classes), out.shape

    # (a) numerics check vs. the kernel's own bf16/f32 math emulated in JAX
    ref_packed = reference_forward_packed(x, packed, num_classes)
    assert jnp.allclose(out, ref_packed, atol=2e-2, rtol=2e-2), (out, ref_packed)

    # (b) semantic check vs. the full-f32 PyTorch-equivalent forward (BN eval mode);
    #     looser tolerance covers bf16 weight + bf16 activation rounding.
    ref_f32 = reference_forward_f32(x, raw_params)
    assert jnp.allclose(out, ref_f32, atol=1e-1, rtol=1e-1), (out, ref_f32)

    print("KERNEL_OK")
</pallas_src>

<mosaic_0001>
module attributes {stable_mosaic.version = 11 : i64} {
  func.func @kernel(%arg0: i32, %arg1: memref<2x1024xbf16, #tpu.memory_space<vmem>>, %arg2: memref<1024x512xbf16, #tpu.memory_space<vmem>>, %arg3: memref<512x256xbf16, #tpu.memory_space<vmem>>, %arg4: memref<256x128xbf16, #tpu.memory_space<vmem>>, %arg5: memref<128x128xbf16, #tpu.memory_space<vmem>>, %arg6: memref<128x128xbf16, #tpu.memory_space<vmem>>, %arg7: memref<1x1152xf32, #tpu.memory_space<vmem>>, %arg8: memref<2x2xf32, #tpu.memory_space<vmem>>) attributes {dimension_semantics = [#tpu.dimension_semantics<parallel>], iteration_bounds = array<i64: 1>, scalar_prefetch = 0 : i64, scratch_operands = 0 : i64, tpu.core_type = #tpu.core_type<tc>, window_params = [{transform_indices = @transform_0, window_bounds = array<i64: 2, 1024>}, {pipeline_mode = #tpu.pipeline_mode<synchronous>, transform_indices = @transform_1, window_bounds = array<i64: 1024, 512>}, {pipeline_mode = #tpu.pipeline_mode<synchronous>, transform_indices = @transform_2, window_bounds = array<i64: 512, 256>}, {pipeline_mode = #tpu.pipeline_mode<synchronous>, transform_indices = @transform_3, window_bounds = array<i64: 256, 128>}, {pipeline_mode = #tpu.pipeline_mode<synchronous>, transform_indices = @transform_4, window_bounds = array<i64: 128, 128>}, {pipeline_mode = #tpu.pipeline_mode<synchronous>, transform_indices = @transform_5, window_bounds = array<i64: 128, 128>}, {pipeline_mode = #tpu.pipeline_mode<synchronous>, transform_indices = @transform_6, window_bounds = array<i64: 1, 1152>}, {transform_indices = @transform_7, window_bounds = array<i64: 2, 2>}]} {
    %c0 = arith.constant 0 : index
    %c0_0 = arith.constant 0 : index
    %0 = vector.load %arg1[%c0, %c0_0] : memref<2x1024xbf16, #tpu.memory_space<vmem>>, vector<2x1024xbf16>
    %c0_1 = arith.constant 0 : index
    %c0_2 = arith.constant 0 : index
    %1 = vector.load %arg7[%c0_1, %c0_2] : memref<1x1152xf32, #tpu.memory_space<vmem>>, vector<1x512xf32>
    %c0_3 = arith.constant 0 : index
    %c0_4 = arith.constant 0 : index
    %2 = vector.load %arg2[%c0_3, %c0_4] : memref<1024x512xbf16, #tpu.memory_space<vmem>>, vector<1024x512xbf16>
    %cst = arith.constant dense<0.000000e+00> : vector<2x512xf32>
    %3 = tpu.matmul %0, %2, %cst {dimension_numbers = #tpu.dot_dimension_numbers<[1], [0], [0], [1], [0, 0, 1, 1], [], []>} : vector<2x1024xbf16>, vector<1024x512xbf16>, vector<2x512xf32> -> vector<2x512xf32>
    %4 = vector.broadcast %1 : vector<1x512xf32> to vector<2x512xf32>
    %5 = arith.addf %3, %4 : vector<2x512xf32>
    %cst_5 = arith.constant 0.000000e+00 : f32
    %6 = vector.broadcast %cst_5 : f32 to vector<2x512xf32>
    %7 = arith.maximumf %5, %6 : vector<2x512xf32>
    %8 = arith.truncf %7 : vector<2x512xf32> to vector<2x512xbf16>
    %c0_6 = arith.constant 0 : index
    %c512 = arith.constant 512 : index
    %9 = vector.load %arg7[%c0_6, %c512] : memref<1x1152xf32, #tpu.memory_space<vmem>>, vector<1x256xf32>
    %c0_7 = arith.constant 0 : index
    %c0_8 = arith.constant 0 : index
    %10 = vector.load %arg3[%c0_7, %c0_8] : memref<512x256xbf16, #tpu.memory_space<vmem>>, vector<512x256xbf16>
    %cst_9 = arith.constant dense<0.000000e+00> : vector<2x256xf32>
    %11 = tpu.matmul %8, %10, %cst_9 {dimension_numbers = #tpu.dot_dimension_numbers<[1], [0], [0], [1], [0, 0, 1, 1], [], []>} : vector<2x512xbf16>, vector<512x256xbf16>, vector<2x256xf32> -> vector<2x256xf32>
    %12 = vector.broadcast %9 : vector<1x256xf32> to vector<2x256xf32>
    %13 = arith.addf %11, %12 : vector<2x256xf32>
    %cst_10 = arith.constant 0.000000e+00 : f32
    %14 = vector.broadcast %cst_10 : f32 to vector<2x256xf32>
    %15 = arith.maximumf %13, %14 : vector<2x256xf32>
    %16 = arith.truncf %15 : vector<2x256xf32> to vector<2x256xbf16>
    %c0_11 = arith.constant 0 : index
    %c768 = arith.constant 768 : index
    %17 = vector.load %arg7[%c0_11, %c768] : memref<1x1152xf32, #tpu.memory_space<vmem>>, vector<1x128xf32>
    %c0_12 = arith.constant 0 : index
    %c0_13 = arith.constant 0 : index
    %18 = vector.load %arg4[%c0_12, %c0_13] : memref<256x128xbf16, #tpu.memory_space<vmem>>, vector<256x128xbf16>
    %cst_14 = arith.constant dense<0.000000e+00> : vector<2x128xf32>
    %19 = tpu.matmul %16, %18, %cst_14 {dimension_numbers = #tpu.dot_dimension_numbers<[1], [0], [0], [1], [0, 0, 1, 1], [], []>} : vector<2x256xbf16>, vector<256x128xbf16>, vector<2x128xf32> -> vector<2x128xf32>
    %20 = vector.broadcast %17 : vector<1x128xf32> to vector<2x128xf32>
    %21 = arith.addf %19, %20 : vector<2x128xf32>
    %cst_15 = arith.constant 0.000000e+00 : f32
    %22 = vector.broadcast %cst_15 : f32 to vector<2x128xf32>
    %23 = arith.maximumf %21, %22 : vector<2x128xf32>
    %24 = arith.truncf %23 : vector<2x128xf32> to vector<2x128xbf16>
    %c0_16 = arith.constant 0 : index
    %c896 = arith.constant 896 : index
    %25 = vector.load %arg7[%c0_16, %c896] : memref<1x1152xf32, #tpu.memory_space<vmem>>, vector<1x128xf32>
    %c0_17 = arith.constant 0 : index
    %c0_18 = arith.constant 0 : index
    %26 = vector.load %arg5[%c0_17, %c0_18] : memref<128x128xbf16, #tpu.memory_space<vmem>>, vector<128x128xbf16>
    %cst_19 = arith.constant dense<0.000000e+00> : vector<2x128xf32>
    %27 = tpu.matmul %24, %26, %cst_19 {dimension_numbers = #tpu.dot_dimension_numbers<[1], [0], [0], [1], [0, 0, 1, 1], [], []>} : vector<2x128xbf16>, vector<128x128xbf16>, vector<2x128xf32> -> vector<2x128xf32>
    %28 = vector.broadcast %25 : vector<1x128xf32> to vector<2x128xf32>
    %29 = arith.addf %27, %28 : vector<2x128xf32>
    %cst_20 = arith.constant 0.000000e+00 : f32
    %30 = vector.broadcast %cst_20 : f32 to vector<2x128xf32>
    %31 = arith.maximumf %29, %30 : vector<2x128xf32>
    %32 = arith.truncf %31 : vector<2x128xf32> to vector<2x128xbf16>
    %c0_21 = arith.constant 0 : index
    %c1024 = arith.constant 1024 : index
    %33 = vector.load %arg7[%c0_21, %c1024] : memref<1x1152xf32, #tpu.memory_space<vmem>>, vector<1x128xf32>
    %c0_22 = arith.constant 0 : index
    %c0_23 = arith.constant 0 : index
    %34 = vector.load %arg6[%c0_22, %c0_23] : memref<128x128xbf16, #tpu.memory_space<vmem>>, vector<128x128xbf16>
    %cst_24 = arith.constant dense<0.000000e+00> : vector<2x128xf32>
    %35 = tpu.matmul %32, %34, %cst_24 {dimension_numbers = #tpu.dot_dimension_numbers<[1], [0], [0], [1], [0, 0, 1, 1], [], []>} : vector<2x128xbf16>, vector<128x128xbf16>, vector<2x128xf32> -> vector<2x128xf32>
    %36 = vector.broadcast %33 : vector<1x128xf32> to vector<2x128xf32>
    %37 = arith.addf %35, %36 : vector<2x128xf32>
    %38 = vector.extract_strided_slice %37 {offsets = [0, 0], sizes = [2, 2], strides = [1, 1]} : vector<2x128xf32> to vector<2x2xf32>
    %c0_25 = arith.constant 0 : index
    %c0_26 = arith.constant 0 : index
    %39 = vector.load %arg8[%c0_25, %c0_26] : memref<2x2xf32, #tpu.memory_space<vmem>>, vector<2x2xf32>
    tpu.vector_store %arg8[%c0_25, %c0_26], %38 {strides = array<i32>} : memref<2x2xf32, #tpu.memory_space<vmem>>, vector<2x2xf32>,
    return
  }
  func.func @transform_0(%arg0: i32) -> (i32, i32) {
    %c0_i32 = arith.constant 0 : i32
    %c0_i32_0 = arith.constant 0 : i32
    return %arg0, %c0_i32 : i32, i32
  }
  func.func @transform_1(%arg0: i32) -> (i32, i32) {
    %c0_i32 = arith.constant 0 : i32
    %c0_i32_0 = arith.constant 0 : i32
    %c0_i32_1 = arith.constant 0 : i32
    return %c0_i32, %c0_i32_0 : i32, i32
  }
  func.func @transform_2(%arg0: i32) -> (i32, i32) {
    %c0_i32 = arith.constant 0 : i32
    %c0_i32_0 = arith.constant 0 : i32
    %c0_i32_1 = arith.constant 0 : i32
    return %c0_i32, %c0_i32_0 : i32, i32
  }
  func.func @transform_3(%arg0: i32) -> (i32, i32) {
    %c0_i32 = arith.constant 0 : i32
    %c0_i32_0 = arith.constant 0 : i32
    %c0_i32_1 = arith.constant 0 : i32
    return %c0_i32, %c0_i32_0 : i32, i32
  }
  func.func @transform_4(%arg0: i32) -> (i32, i32) {
    %c0_i32 = arith.constant 0 : i32
    %c0_i32_0 = arith.constant 0 : i32
    %c0_i32_1 = arith.constant 0 : i32
    return %c0_i32, %c0_i32_0 : i32, i32
  }
  func.func @transform_5(%arg0: i32) -> (i32, i32) {
    %c0_i32 = arith.constant 0 : i32
    %c0_i32_0 = arith.constant 0 : i32
    %c0_i32_1 = arith.constant 0 : i32
    return %c0_i32, %c0_i32_0 : i32, i32
  }
  func.func @transform_6(%arg0: i32) -> (i32, i32) {
    %c0_i32 = arith.constant 0 : i32
    %c0_i32_0 = arith.constant 0 : i32
    %c0_i32_1 = arith.constant 0 : i32
    return %c0_i32, %c0_i32_0 : i32, i32
  }
  func.func @transform_7(%arg0: i32) -> (i32, i32) {
    %c0_i32 = arith.constant 0 : i32
    %c0_i32_0 = arith.constant 0 : i32
    return %arg0, %c0_i32 : i32, i32
  }
}

</mosaic_0001>

<llo_original>
// kernel: tpu_custom_call.1
$region0: #{tpu_custom_call.1}
  #allocation0 [shape = 'u32[]', space=smem, size = 0x4, offset = 0x4, fixed_abs, tag = 'smem constant byte address 0x4 - core index']
  #allocation1 [shape = 'u32[144,128]{1,0:T(1,128)}', space=vmem, size = 0x12000, scoped, tag = 'internal scratch']
  %s0 = inlined_call_operand.hbm [shape: bf16[2,1024], index: 0, kind: input, shape index: {}]
  %s1 = inlined_call_operand.hbm [shape: bf16[1024,512], index: 1, kind: input, shape index: {}]
  %s2 = inlined_call_operand.hbm [shape: bf16[512,256], index: 2, kind: input, shape index: {}]
  %s3 = inlined_call_operand.hbm [shape: bf16[256,128], index: 3, kind: input, shape index: {}]
  %s4 = inlined_call_operand.hbm [shape: bf16[128,128], index: 4, kind: input, shape index: {}]
  %s5 = inlined_call_operand.hbm [shape: bf16[128,128], index: 5, kind: input, shape index: {}]
  %s6 = inlined_call_operand.vmem [shape: f32[1,1152], index: 6, kind: input, shape index: {}]
  %s7 = inlined_call_operand.hbm [shape: f32[2,2], index: 7, kind: output, shape index: {}]
  %s8 = sld [smem:[#allocation0]]
  $region62: #{tpu_custom_call.1} parent=0
    _
  %s10 = ssub.s32 1, %s8
  %s11 = scalar_select 0, %s10, %s8
  $region1: #{tpu_custom_call.1} parent=0
    #allocation2 [shape = 'u8[4096]{0}', space=vmem, size = 0x1000, scoped, tag = 'input window, operand 0, single buffered']
    #allocation3 [shape = 's32[1]{0}', space=sflag, size = 0x4, scoped, tag = 'scoped memory for tpu_custom_call.1']
    #allocation4 [shape = 's32[1]{0}', space=sflag, size = 0x4, scoped, tag = 'scoped memory for tpu_custom_call.1']
    #allocation5 [shape = 'u8[1048576]{0}', space=vmem, size = 0x100000, scoped, tag = 'input window, operand 1, single buffered']
    #allocation6 [shape = 's32[1]{0}', space=sflag, size = 0x4, scoped, tag = 'scoped memory for tpu_custom_call.1']
    #allocation7 [shape = 'u8[262144]{0}', space=vmem, size = 0x40000, scoped, tag = 'input window, operand 2, single buffered']
    #allocation8 [shape = 'u8[65536]{0}', space=vmem, size = 0x10000, scoped, tag = 'input window, operand 3, single buffered']
    #allocation9 [shape = 's32[1]{0}', space=sflag, size = 0x4, scoped, tag = 'scoped memory for tpu_custom_call.1']
    #allocation10 [shape = 'u8[32768]{0}', space=vmem, size = 0x8000, scoped, tag = 'input window, operand 4, single buffered']
    #allocation11 [shape = 'u8[32768]{0}', space=vmem, size = 0x8000, scoped, tag = 'input window, operand 5, single buffered']
    #allocation12 [shape = 's32[1]{0}', space=sflag, size = 0x4, scoped, tag = 'scoped memory for tpu_custom_call.1']
    #allocation13 [shape = 'u8[1024]{0}', space=vmem, size = 0x400, scoped, tag = 'output window, operand 0, single buffered']
    %12 = vsyncpa [#allocation3], 0
    %13 = vsyncpa [#allocation6], 0
    %14 = vsyncpa [#allocation9], 0
    %15 = vsyncpa [#allocation12], 0
    %16 = vsyncpa [#allocation4], 0
    // Predicated region
    $region2: #{tpu_custom_call.1} parent=1 // pred_check
      _
    $region3: #{tpu_custom_call.1} parent=1 // pred_check_branch
      %18 = sbr.rel (0) target = $region5
    $region4: #{tpu_custom_call.1} parent=1 // pred_region
      %s20 = ssub.s32 128, 128
      %21 = vsyncadd [#allocation3], %s20
      %s23 = sshll.u32 [#allocation2], 4
      %s24 = int_to_ptr.vmem [resolvable:$true] %s23
      %26 = dma.hbm_to_vmem [thread:$0]  %s0, 128, %s24, [#allocation3]
    $region5: #{tpu_custom_call.1} parent=1 // pred_fallthru
      _
    // Predicated region
    $region6: #{tpu_custom_call.1} parent=1 // pred_check
      _
    $region7: #{tpu_custom_call.1} parent=1 // pred_check_branch
      %28 = sbr.rel (0) target = $region9
    $region8: #{tpu_custom_call.1} parent=1 // pred_region
      %s30 = ssub.s32 32768, 32768
      %31 = vsyncadd [#allocation6], %s30
      %s32 = sshll.u32 [#allocation5], 4
      %s33 = int_to_ptr.vmem [resolvable:$true] %s32
      %38 = dma.hbm_to_vmem [thread:$0]  %s1, 32768, %s33, [#allocation6], 256, 256, 16
    $region9: #{tpu_custom_call.1} parent=1 // pred_fallthru
      _
    // Predicated region
    $region10: #{tpu_custom_call.1} parent=1 // pred_check
      _
    $region11: #{tpu_custom_call.1} parent=1 // pred_check_branch
      %40 = sbr.rel (0) target = $region13
    $region12: #{tpu_custom_call.1} parent=1 // pred_region
      %s42 = ssub.s32 8192, 8192
      %43 = vsyncadd [#allocation6], %s42
      %s44 = sshll.u32 [#allocation7], 4
      %s45 = int_to_ptr.vmem [resolvable:$true] %s44
      %50 = dma.hbm_to_vmem [thread:$0]  %s2, 8192, %s45, [#allocation6], 128, 128, 8
    $region13: #{tpu_custom_call.1} parent=1 // pred_fallthru
      _
    // Predicated region
    $region14: #{tpu_custom_call.1} parent=1 // pred_check
      _
    $region15: #{tpu_custom_call.1} parent=1 // pred_check_branch
      %52 = sbr.rel (0) target = $region17
    $region16: #{tpu_custom_call.1} parent=1 // pred_region
      %s54 = ssub.s32 2048, 2048
      %55 = vsyncadd [#allocation9], %s54
      %s56 = sshll.u32 [#allocation8], 4
      %s57 = int_to_ptr.vmem [resolvable:$true] %s56
      %62 = dma.hbm_to_vmem [thread:$0]  %s3, 2048, %s57, [#allocation9], 64, 64, 4
    $region17: #{tpu_custom_call.1} parent=1 // pred_fallthru
      _
    // Predicated region
    $region18: #{tpu_custom_call.1} parent=1 // pred_check
      _
    $region19: #{tpu_custom_call.1} parent=1 // pred_check_branch
      %64 = sbr.rel (0) target = $region21
    $region20: #{tpu_custom_call.1} parent=1 // pred_region
      %s66 = ssub.s32 1024, 1024
      %67 = vsyncadd [#allocation9], %s66
      %s68 = sshll.u32 [#allocation10], 4
      %s69 = int_to_ptr.vmem [resolvable:$true] %s68
      %74 = dma.hbm_to_vmem [thread:$0]  %s4, 1024, %s69, [#allocation9], 64, 64, 4
    $region21: #{tpu_custom_call.1} parent=1 // pred_fallthru
      _
    // Predicated region
    $region22: #{tpu_custom_call.1} parent=1 // pred_check
      _
    $region23: #{tpu_custom_call.1} parent=1 // pred_check_branch
      %76 = sbr.rel (0) target = $region25
    $region24: #{tpu_custom_call.1} parent=1 // pred_region
      %s78 = ssub.s32 1024, 1024
      %79 = vsyncadd [#allocation12], %s78
      %s80 = sshll.u32 [#allocation11], 4
      %s81 = int_to_ptr.vmem [resolvable:$true] %s80
      %86 = dma.hbm_to_vmem [thread:$0]  %s5, 1024, %s81, [#allocation12], 64, 64, 4
    $region25: #{tpu_custom_call.1} parent=1 // pred_fallthru
      _
    // Predicated region
    $region26: #{tpu_custom_call.1} parent=1 // pred_check
      _
    $region27: #{tpu_custom_call.1} parent=1 // pred_check_branch
      %88 = sbr.rel (0) target = $region29
    $region28: #{tpu_custom_call.1} parent=1 // pred_region
      _
    $region29: #{tpu_custom_call.1} parent=1 // pred_fallthru
      _
    // Predicated region
    $region30: #{tpu_custom_call.1} parent=1 // pred_check
      _
    $region31: #{tpu_custom_call.1} parent=1 // pred_check_branch
      %90 = sbr.rel (0) target = $region33
    $region32: #{tpu_custom_call.1} parent=1 // pred_region
      %91 = dma.done [#allocation3], 128
    $region33: #{tpu_custom_call.1} parent=1 // pred_fallthru
      _
    // Predicated region
    $region34: #{tpu_custom_call.1} parent=1 // pred_check
      _
    $region35: #{tpu_custom_call.1} parent=1 // pred_check_branch
      %93 = sbr.rel (0) target = $region37
    $region36: #{tpu_custom_call.1} parent=1 // pred_region
      %94 = dma.done [#allocation6], 32768
    $region37: #{tpu_custom_call.1} parent=1 // pred_fallthru
      _
    // Predicated region
    $region38: #{tpu_custom_call.1} parent=1 // pred_check
      _
    $region39: #{tpu_custom_call.1} parent=1 // pred_check_branch
      %96 = sbr.rel (0) target = $region41
    $region40: #{tpu_custom_call.1} parent=1 // pred_region
      %97 = dma.done [#allocation6], 8192
    $region41: #{tpu_custom_call.1} parent=1 // pred_fallthru
      _
    // Predicated region
    $region42: #{tpu_custom_call.1} parent=1 // pred_check
      _
    $region43: #{tpu_custom_call.1} parent=1 // pred_check_branch
      %99 = sbr.rel (0) target = $region45
    $region44: #{tpu_custom_call.1} parent=1 // pred_region
      %100 = dma.done [#allocation9], 2048
    $region45: #{tpu_custom_call.1} parent=1 // pred_fallthru
      _
    // Predicated region
    $region46: #{tpu_custom_call.1} parent=1 // pred_check
      _
    $region47: #{tpu_custom_call.1} parent=1 // pred_check_branch
      %102 = sbr.rel (0) target = $region49
    $region48: #{tpu_custom_call.1} parent=1 // pred_region
      %103 = dma.done [#allocation9], 1024
    $region49: #{tpu_custom_call.1} parent=1 // pred_fallthru
      _
    // Predicated region
    $region50: #{tpu_custom_call.1} parent=1 // pred_check
      _
    $region51: #{tpu_custom_call.1} parent=1 // pred_check_branch
      %105 = sbr.rel (0) target = $region53
    $region52: #{tpu_custom_call.1} parent=1 // pred_region
      %106 = dma.done [#allocation12], 1024
    $region53: #{tpu_custom_call.1} parent=1 // pred_fallthru
      _
    %v108 = vld [vmem:[#allocation2] sm:$0xff]
    %v109 = vld [vmem:[%s6] sm:$0xf]
    %v110 = vld [vmem:[#allocation5] sm:$0xff]
    %v111 = vld [vmem:[#allocation5 + $0x8] sm:$0xff]
    %v112 = vld [vmem:[#allocation5 + $0x10] sm:$0xff]
    %v113 = vld [vmem:[#allocation5 + $0x18] sm:$0xff]
    %v114 = vld [vmem:[#allocation5 + $0x20] sm:$0xff]
    %v115 = vld [vmem:[#allocation5 + $0x28] sm:$0xff]
    %v116 = vld [vmem:[#allocation5 + $0x30] sm:$0xff]
    %v117 = vld [vmem:[#allocation5 + $0x38] sm:$0xff]
    %v118 = vld [vmem:[#allocation5 + $0x40] sm:$0xff]
    %v119 = vld [vmem:[#allocation5 + $0x48] sm:$0xff]
    %v120 = vld [vmem:[#allocation5 + $0x50] sm:$0xff]
    %v121 = vld [vmem:[#allocation5 + $0x58] sm:$0xff]
    %v122 = vld [vmem:[#allocation5 + $0x60] sm:$0xff]
    %v123 = vld [vmem:[#allocation5 + $0x68] sm:$0xff]
    %v124 = vld [vmem:[#allocation5 + $0x70] sm:$0xff]
    %v125 = vld [vmem:[#allocation5 + $0x78] sm:$0xff]
    %v126 = vld [vmem:[#allocation5 + $0x80] sm:$0xff]
    %v127 = vld [vmem:[#allocation5 + $0x88] sm:$0xff]
    %v128 = vld [vmem:[#allocation5 + $0x90] sm:$0xff]
    %v129 = vld [vmem:[#allocation5 + $0x98] sm:$0xff]
    %v130 = vld [vmem:[#allocation5 + $0xa0] sm:$0xff]
    %v131 = vld [vmem:[#allocation5 + $0xa8] sm:$0xff]
    %v132 = vld [vmem:[#allocation5 + $0xb0] sm:$0xff]
    %v133 = vld [vmem:[#allocation5 + $0xb8] sm:$0xff]
    %v134 = vld [vmem:[#allocation5 + $0xc0] sm:$0xff]
    %v135 = vld [vmem:[#allocation5 + $0xc8] sm:$0xff]
    %v136 = vld [vmem:[#allocation5 + $0xd0] sm:$0xff]
    %v137 = vld [vmem:[#allocation5 + $0xd8] sm:$0xff]
    %v138 = vld [vmem:[#allocation5 + $0xe0] sm:$0xff]
    %v139 = vld [vmem:[#allocation5 + $0xe8] sm:$0xff]
    %v140 = vld [vmem:[#allocation5 + $0xf0] sm:$0xff]
    %v141 = vld [vmem:[#allocation5 + $0xf8] sm:$0xff]
    %v142 = vld [vmem:[#allocation5 + $0x100] sm:$0xff]
    %v143 = vld [vmem:[#allocation5 + $0x108] sm:$0xff]
    %v144 = vld [vmem:[#allocation5 + $0x110] sm:$0xff]
    %v145 = vld [vmem:[#allocation5 + $0x118] sm:$0xff]
    %v146 = vld [vmem:[#allocation5 + $0x120] sm:$0xff]
    %v147 = vld [vmem:[#allocation5 + $0x128] sm:$0xff]
    %v148 = vld [vmem:[#allocation5 + $0x130] sm:$0xff]
    %v149 = vld [vmem:[#allocation5 + $0x138] sm:$0xff]
    %v150 = vld [vmem:[#allocation5 + $0x140] sm:$0xff]
    %v151 = vld [vmem:[#allocation5 + $0x148] sm:$0xff]
    %v152 = vld [vmem:[#allocation5 + $0x150] sm:$0xff]
    %v153 = vld [vmem:[#allocation5 + $0x158] sm:$0xff]
    %v154 = vld [vmem:[#allocation5 + $0x160] sm:$0xff]
    %v155 = vld [vmem:[#allocation5 + $0x168] sm:$0xff]
    %v156 = vld [vmem:[#allocation5 + $0x170] sm:$0xff]
    %v157 = vld [vmem:[#allocation5 + $0x178] sm:$0xff]
    %v158 = vld [vmem:[#allocation5 + $0x180] sm:$0xff]
    %v159 = vld [vmem:[#allocation5 + $0x188] sm:$0xff]
    %v160 = vld [vmem:[#allocation5 + $0x190] sm:$0xff]
    %v161 = vld [vmem:[#allocation5 + $0x198] sm:$0xff]
    %v162 = vld [vmem:[#allocation5 + $0x1a0] sm:$0xff]
    %v163 = vld [vmem:[#allocation5 + $0x1a8] sm:$0xff]
    %v164 = vld [vmem:[#allocation5 + $0x1b0] sm:$0xff]
    %v165 = vld [vmem:[#allocation5 + $0x1b8] sm:$0xff]
    %v166 = vld [vmem:[#allocation5 + $0x1c0] sm:$0xff]
    %v167 = vld [vmem:[#allocation5 + $0x1c8] sm:$0xff]
    %v168 = vld [vmem:[#allocation5 + $0x1d0] sm:$0xff]
    %v169 = vld [vmem:[#allocation5 + $0x1d8] sm:$0xff]
    %v170 = vld [vmem:[#allocation5 + $0x1e0] sm:$0xff]
    %v171 = vld [vmem:[#allocation5 + $0x1e8] sm:$0xff]
    %v172 = vld [vmem:[#allocation5 + $0x1f0] sm:$0xff]
    %v173 = vld [vmem:[#allocation5 + $0x1f8] sm:$0xff]
    %v174 = vld [vmem:[#allocation5 + $0x200] sm:$0xff]
    %v175 = vld [vmem:[#allocation5 + $0x208] sm:$0xff]
    %v176 = vld [vmem:[#allocation5 + $0x210] sm:$0xff]
    %v177 = vld [vmem:[#allocation5 + $0x218] sm:$0xff]
    %v178 = vld [vmem:[#allocation5 + $0x220] sm:$0xff]
    %v179 = vld [vmem:[#allocation5 + $0x228] sm:$0xff]
    %v180 = vld [vmem:[#allocation5 + $0x230] sm:$0xff]
    %v181 = vld [vmem:[#allocation5 + $0x238] sm:$0xff]
    %v182 = vld [vmem:[#allocation5 + $0x240] sm:$0xff]
    %v183 = vld [vmem:[#allocation5 + $0x248] sm:$0xff]
    %v184 = vld [vmem:[#allocation5 + $0x250] sm:$0xff]
    %v185 = vld [vmem:[#allocation5 + $0x258] sm:$0xff]
    %v186 = vld [vmem:[#allocation5 + $0x260] sm:$0xff]
    %v187 = vld [vmem:[#allocation5 + $0x268] sm:$0xff]
    %v188 = vld [vmem:[#allocation5 + $0x270] sm:$0xff]
    %v189 = vld [vmem:[#allocation5 + $0x278] sm:$0xff]
    %v190 = vld [vmem:[#allocation5 + $0x280] sm:$0xff]
    %v191 = vld [vmem:[#allocation5 + $0x288] sm:$0xff]
    %v192 = vld [vmem:[#allocation5 + $0x290] sm:$0xff]
    %v193 = vld [vmem:[#allocation5 + $0x298] sm:$0xff]
    %v194 = vld [vmem:[#allocation5 + $0x2a0] sm:$0xff]
    %v195 = vld [vmem:[#allocation5 + $0x2a8] sm:$0xff]
    %v196 = vld [vmem:[#allocation5 + $0x2b0] sm:$0xff]
    %v197 = vld [vmem:[#allocation5 + $0x2b8] sm:$0xff]
    %v198 = vld [vmem:[#allocation5 + $0x2c0] sm:$0xff]
    %v199 = vld [vmem:[#allocation5 + $0x2c8] sm:$0xff]
    %v200 = vld [vmem:[#allocation5 + $0x2d0] sm:$0xff]
    %v201 = vld [vmem:[#allocation5 + $0x2d8] sm:$0xff]
    %v202 = vld [vmem:[#allocation5 + $0x2e0] sm:$0xff]
    %v203 = vld [vmem:[#allocation5 + $0x2e8] sm:$0xff]
    %v204 = vld [vmem:[#allocation5 + $0x2f0] sm:$0xff]
    %v205 = vld [vmem:[#allocation5 + $0x2f8] sm:$0xff]
    %v206 = vld [vmem:[#allocation5 + $0x300] sm:$0xff]
    %v207 = vld [vmem:[#allocation5 + $0x308] sm:$0xff]
    %v208 = vld [vmem:[#allocation5 + $0x310] sm:$0xff]
    %v209 = vld [vmem:[#allocation5 + $0x318] sm:$0xff]
    %v210 = vld [vmem:[#allocation5 + $0x320] sm:$0xff]
    %v211 = vld [vmem:[#allocation5 + $0x328] sm:$0xff]
    %v212 = vld [vmem:[#allocation5 + $0x330] sm:$0xff]
    %v213 = vld [vmem:[#allocation5 + $0x338] sm:$0xff]
    %v214 = vld [vmem:[#allocation5 + $0x340] sm:$0xff]
    %v215 = vld [vmem:[#allocation5 + $0x348] sm:$0xff]
    %v216 = vld [vmem:[#allocation5 + $0x350] sm:$0xff]
    %v217 = vld [vmem:[#allocation5 + $0x358] sm:$0xff]
    %v218 = vld [vmem:[#allocation5 + $0x360] sm:$0xff]
    %v219 = vld [vmem:[#allocation5 + $0x368] sm:$0xff]
    %v220 = vld [vmem:[#allocation5 + $0x370] sm:$0xff]
    %v221 = vld [vmem:[#allocation5 + $0x378] sm:$0xff]
    %v222 = vld [vmem:[#allocation5 + $0x380] sm:$0xff]
    %v223 = vld [vmem:[#allocation5 + $0x388] sm:$0xff]
    %v224 = vld [vmem:[#allocation5 + $0x390] sm:$0xff]
    %v225 = vld [vmem:[#allocation5 + $0x398] sm:$0xff]
    %v226 = vld [vmem:[#allocation5 + $0x3a0] sm:$0xff]
    %v227 = vld [vmem:[#allocation5 + $0x3a8] sm:$0xff]
    %v228 = vld [vmem:[#allocation5 + $0x3b0] sm:$0xff]
    %v229 = vld [vmem:[#allocation5 + $0x3b8] sm:$0xff]
    %v230 = vld [vmem:[#allocation5 + $0x3c0] sm:$0xff]
    %v231 = vld [vmem:[#allocation5 + $0x3c8] sm:$0xff]
    %v232 = vld [vmem:[#allocation5 + $0x3d0] sm:$0xff]
    %v233 = vld [vmem:[#allocation5 + $0x3d8] sm:$0xff]
    %v234 = vld [vmem:[#allocation5 + $0x3e0] sm:$0xff]
    %v235 = vld [vmem:[#allocation5 + $0x3e8] sm:$0xff]
    %v236 = vld [vmem:[#allocation5 + $0x3f0] sm:$0xff]
    %v237 = vld [vmem:[#allocation5 + $0x3f8] sm:$0xff]
    %v238 = vld [vmem:[#allocation5 + $0x400] sm:$0xff]
    %v239 = vld [vmem:[#allocation5 + $0x408] sm:$0xff]
    %v240 = vld [vmem:[#allocation5 + $0x410] sm:$0xff]
    %v241 = vld [vmem:[#allocation5 + $0x418] sm:$0xff]
    %v242 = vld [vmem:[#allocation5 + $0x420] sm:$0xff]
    %v243 = vld [vmem:[#allocation5 + $0x428] sm:$0xff]
    %v244 = vld [vmem:[#allocation5 + $0x430] sm:$0xff]
    %v245 = vld [vmem:[#allocation5 + $0x438] sm:$0xff]
    %v246 = vld [vmem:[#allocation5 + $0x440] sm:$0xff]
    %v247 = vld [vmem:[#allocation5 + $0x448] sm:$0xff]
    %v248 = vld [vmem:[#allocation5 + $0x450] sm:$0xff]
    %v249 = vld [vmem:[#allocation5 + $0x458] sm:$0xff]
    %v250 = vld [vmem:[#allocation5 + $0x460] sm:$0xff]
    %v251 = vld [vmem:[#allocation5 + $0x468] sm:$0xff]
    %v252 = vld [vmem:[#allocation5 + $0x470] sm:$0xff]
    %v253 = vld [vmem:[#allocation5 + $0x478] sm:$0xff]
    %v254 = vld [vmem:[#allocation5 + $0x480] sm:$0xff]
    %v255 = vld [vmem:[#allocation5 + $0x488] sm:$0xff]
    %v256 = vld [vmem:[#allocation5 + $0x490] sm:$0xff]
    %v257 = vld [vmem:[#allocation5 + $0x498] sm:$0xff]
    %v258 = vld [vmem:[#allocation5 + $0x4a0] sm:$0xff]
    %v259 = vld [vmem:[#allocation5 + $0x4a8] sm:$0xff]
    %v260 = vld [vmem:[#allocation5 + $0x4b0] sm:$0xff]
    %v261 = vld [vmem:[#allocation5 + $0x4b8] sm:$0xff]
    %v262 = vld [vmem:[#allocation5 + $0x4c0] sm:$0xff]
    %v263 = vld [vmem:[#allocation5 + $0x4c8] sm:$0xff]
    %v264 = vld [vmem:[#allocation5 + $0x4d0] sm:$0xff]
    %v265 = vld [vmem:[#allocation5 + $0x4d8] sm:$0xff]
    %v266 = vld [vmem:[#allocation5 + $0x4e0] sm:$0xff]
    %v267 = vld [vmem:[#allocation5 + $0x4e8] sm:$0xff]
    %v268 = vld [vmem:[#allocation5 + $0x4f0] sm:$0xff]
    %v269 = vld [vmem:[#allocation5 + $0x4f8] sm:$0xff]
    %v270 = vld [vmem:[#allocation5 + $0x500] sm:$0xff]
    %v271 = vld [vmem:[#allocation5 + $0x508] sm:$0xff]
    %v272 = vld [vmem:[#allocation5 + $0x510] sm:$0xff]
    %v273 = vld [vmem:[#allocation5 + $0x518] sm:$0xff]
    %v274 = vld [vmem:[#allocation5 + $0x520] sm:$0xff]
    %v275 = vld [vmem:[#allocation5 + $0x528] sm:$0xff]
    %v276 = vld [vmem:[#allocation5 + $0x530] sm:$0xff]
    %v277 = vld [vmem:[#allocation5 + $0x538] sm:$0xff]
    %v278 = vld [vmem:[#allocation5 + $0x540] sm:$0xff]
    %v279 = vld [vmem:[#allocation5 + $0x548] sm:$0xff]
    %v280 = vld [vmem:[#allocation5 + $0x550] sm:$0xff]
    %v281 = vld [vmem:[#allocation5 + $0x558] sm:$0xff]
    %v282 = vld [vmem:[#allocation5 + $0x560] sm:$0xff]
    %v283 = vld [vmem:[#allocation5 + $0x568] sm:$0xff]
    %v284 = vld [vmem:[#allocation5 + $0x570] sm:$0xff]
    %v285 = vld [vmem:[#allocation5 + $0x578] sm:$0xff]
    %v286 = vld [vmem:[#allocation5 + $0x580] sm:$0xff]
    %v287 = vld [vmem:[#allocation5 + $0x588] sm:$0xff]
    %v288 = vld [vmem:[#allocation5 + $0x590] sm:$0xff]
    %v289 = vld [vmem:[#allocation5 + $0x598] sm:$0xff]
    %v290 = vld [vmem:[#allocation5 + $0x5a0] sm:$0xff]
    %v291 = vld [vmem:[#allocation5 + $0x5a8] sm:$0xff]
    %v292 = vld [vmem:[#allocation5 + $0x5b0] sm:$0xff]
    %v293 = vld [vmem:[#allocation5 + $0x5b8] sm:$0xff]
    %v294 = vld [vmem:[#allocation5 + $0x5c0] sm:$0xff]
    %v295 = vld [vmem:[#allocation5 + $0x5c8] sm:$0xff]
    %v296 = vld [vmem:[#allocation5 + $0x5d0] sm:$0xff]
    %v297 = vld [vmem:[#allocation5 + $0x5d8] sm:$0xff]
    %v298 = vld [vmem:[#allocation5 + $0x5e0] sm:$0xff]
    %v299 = vld [vmem:[#allocation5 + $0x5e8] sm:$0xff]
    %v300 = vld [vmem:[#allocation5 + $0x5f0] sm:$0xff]
    %v301 = vld [vmem:[#allocation5 + $0x5f8] sm:$0xff]
    %v302 = vld [vmem:[#allocation5 + $0x600] sm:$0xff]
    %v303 = vld [vmem:[#allocation5 + $0x608] sm:$0xff]
    %v304 = vld [vmem:[#allocation5 + $0x610] sm:$0xff]
    %v305 = vld [vmem:[#allocation5 + $0x618] sm:$0xff]
    %v306 = vld [vmem:[#allocation5 + $0x620] sm:$0xff]
    %v307 = vld [vmem:[#allocation5 + $0x628] sm:$0xff]
    %v308 = vld [vmem:[#allocation5 + $0x630] sm:$0xff]
    %v309 = vld [vmem:[#allocation5 + $0x638] sm:$0xff]
    %v310 = vld [vmem:[#allocation5 + $0x640] sm:$0xff]
    %v311 = vld [vmem:[#allocation5 + $0x648] sm:$0xff]
    %v312 = vld [vmem:[#allocation5 + $0x650] sm:$0xff]
    %v313 = vld [vmem:[#allocation5 + $0x658] sm:$0xff]
    %v314 = vld [vmem:[#allocation5 + $0x660] sm:$0xff]
    %v315 = vld [vmem:[#allocation5 + $0x668] sm:$0xff]
    %v316 = vld [vmem:[#allocation5 + $0x670] sm:$0xff]
    %v317 = vld [vmem:[#allocation5 + $0x678] sm:$0xff]
    %v318 = vld [vmem:[#allocation5 + $0x680] sm:$0xff]
    %v319 = vld [vmem:[#allocation5 + $0x688] sm:$0xff]
    %v320 = vld [vmem:[#allocation5 + $0x690] sm:$0xff]
    %v321 = vld [vmem:[#allocation5 + $0x698] sm:$0xff]
    %v322 = vld [vmem:[#allocation5 + $0x6a0] sm:$0xff]
    %v323 = vld [vmem:[#allocation5 + $0x6a8] sm:$0xff]
    %v324 = vld [vmem:[#allocation5 + $0x6b0] sm:$0xff]
    %v325 = vld [vmem:[#allocation5 + $0x6b8] sm:$0xff]
    %v326 = vld [vmem:[#allocation5 + $0x6c0] sm:$0xff]
    %v327 = vld [vmem:[#allocation5 + $0x6c8] sm:$0xff]
    %v328 = vld [vmem:[#allocation5 + $0x6d0] sm:$0xff]
    %v329 = vld [vmem:[#allocation5 + $0x6d8] sm:$0xff]
    %v330 = vld [vmem:[#allocation5 + $0x6e0] sm:$0xff]
    %v331 = vld [vmem:[#allocation5 + $0x6e8] sm:$0xff]
    %v332 = vld [vmem:[#allocation5 + $0x6f0] sm:$0xff]
    %v333 = vld [vmem:[#allocation5 + $0x6f8] sm:$0xff]
    %v334 = vld [vmem:[#allocation5 + $0x700] sm:$0xff]
    %v335 = vld [vmem:[#allocation5 + $0x708] sm:$0xff]
    %v336 = vld [vmem:[#allocation5 + $0x710] sm:$0xff]
    %v337 = vld [vmem:[#allocation5 + $0x718] sm:$0xff]
    %v338 = vld [vmem:[#allocation5 + $0x720] sm:$0xff]
    %v339 = vld [vmem:[#allocation5 + $0x728] sm:$0xff]
    %v340 = vld [vmem:[#allocation5 + $0x730] sm:$0xff]
    %v341 = vld [vmem:[#allocation5 + $0x738] sm:$0xff]
    %v342 = vld [vmem:[#allocation5 + $0x740] sm:$0xff]
    %v343 = vld [vmem:[#allocation5 + $0x748] sm:$0xff]
    %v344 = vld [vmem:[#allocation5 + $0x750] sm:$0xff]
    %v345 = vld [vmem:[#allocation5 + $0x758] sm:$0xff]
    %v346 = vld [vmem:[#allocation5 + $0x760] sm:$0xff]
    %v347 = vld [vmem:[#allocation5 + $0x768] sm:$0xff]
    %v348 = vld [vmem:[#allocation5 + $0x770] sm:$0xff]
    %v349 = vld [vmem:[#allocation5 + $0x778] sm:$0xff]
    %v350 = vld [vmem:[#allocation5 + $0x780] sm:$0xff]
    %v351 = vld [vmem:[#allocation5 + $0x788] sm:$0xff]
    %v352 = vld [vmem:[#allocation5 + $0x790] sm:$0xff]
    %v353 = vld [vmem:[#allocation5 + $0x798] sm:$0xff]
    %v354 = vld [vmem:[#allocation5 + $0x7a0] sm:$0xff]
    %v355 = vld [vmem:[#allocation5 + $0x7a8] sm:$0xff]
    %v356 = vld [vmem:[#allocation5 + $0x7b0] sm:$0xff]
    %v357 = vld [vmem:[#allocation5 + $0x7b8] sm:$0xff]
    %v358 = vld [vmem:[#allocation5 + $0x7c0] sm:$0xff]
    %v359 = vld [vmem:[#allocation5 + $0x7c8] sm:$0xff]
    %v360 = vld [vmem:[#allocation5 + $0x7d0] sm:$0xff]
    %v361 = vld [vmem:[#allocation5 + $0x7d8] sm:$0xff]
    %v362 = vld [vmem:[#allocation5 + $0x7e0] sm:$0xff]
    %v363 = vld [vmem:[#allocation5 + $0x7e8] sm:$0xff]
    %v364 = vld [vmem:[#allocation5 + $0x7f0] sm:$0xff]
    %v365 = vld [vmem:[#allocation5 + $0x7f8] sm:$0xff]
    %v367 = vlaneseq
    %v368 = vshrl.u32 %v367, 7
    %v369 = vsub.s32 0, %v368
    %v370 = vrot.slane %v109, %v369
    %v371 = vlaneseq
    %v372 = vshrl.u32 %v371, 7
    %v373 = vsub.s32 1, %v372
    %v374 = vrot.slane %v109, %v373
    %v375 = vlaneseq
    %v376 = vshrl.u32 %v375, 7
    %v377 = vsub.s32 2, %v376
    %v378 = vrot.slane %v109, %v377
    %v379 = vlaneseq
    %v380 = vshrl.u32 %v379, 7
    %v381 = vsub.s32 3, %v380
    %v382 = vrot.slane %v109, %v381
    %v388 = vcombine.high %v108, %v108
    %v390 = vunpack.c.l.s4 1966171168
    %v391 = vunpack.c.0.s8 %v390
    %v392 = vlaneseq
    %v393 = vshrl.u32 %v392, 7
    %v394 = vsub.s32 %v391, %v393
    %v395 = vrot.slane %v108, %v394
    %v397 = vunpack.c.l.s4 1966171168
    %v398 = vunpack.c.0.s8 %v397
    %v399 = vlaneseq
    %v400 = vshrl.u32 %v399, 7
    %v401 = vsub.s32 %v398, %v400
    %v402 = vrot.slane %v388, %v401
    %v403 = vcombine.high %v395, %v395
    %v404 = vcombine.high %v402, %v402
    %v406 = vunpack.c.l.s4 1966171168
    %v407 = vunpack.c.0.s8 %v406
    %v408 = vlaneseq
    %v409 = vshrl.u32 %v408, 7
    %v410 = vsub.s32 %v407, %v409
    %v411 = vrot.slane %v395, %v410
    %v413 = vunpack.c.l.s4 1966171168
    %v414 = vunpack.c.0.s8 %v413
    %v415 = vlaneseq
    %v416 = vshrl.u32 %v415, 7
    %v417 = vsub.s32 %v414, %v416
    %v418 = vrot.slane %v402, %v417
    %v420 = vunpack.c.l.s4 1966171168
    %v421 = vunpack.c.0.s8 %v420
    %v422 = vlaneseq
    %v423 = vshrl.u32 %v422, 7
    %v424 = vsub.s32 %v421, %v423
    %v425 = vrot.slane %v403, %v424
    %v427 = vunpack.c.l.s4 1966171168
    %v428 = vunpack.c.0.s8 %v427
    %v429 = vlaneseq
    %v430 = vshrl.u32 %v429, 7
    %v431 = vsub.s32 %v428, %v430
    %v432 = vrot.slane %v404, %v431
    %v433 = vcombine.high %v411, %v411
    %v434 = vcombine.high %v418, %v418
    %v435 = vcombine.high %v425, %v425
    %v436 = vcombine.high %v432, %v432
    %v701 = vunpack.c.l.b16 %v110
    %v702 = vunpack.c.h.b16 %v110
    %v703 = vunpack.c.l.b16 %v111
    %v704 = vunpack.c.h.b16 %v111
    %v705 = vunpack.c.l.b16 %v112
    %v706 = vunpack.c.h.b16 %v112
    %v707 = vunpack.c.l.b16 %v113
    %v708 = vunpack.c.h.b16 %v113
    %v709 = vunpack.c.l.b16 %v114
    %v710 = vunpack.c.h.b16 %v114
    %v711 = vunpack.c.l.b16 %v115
    %v712 = vunpack.c.h.b16 %v115
    %v713 = vunpack.c.l.b16 %v116
    %v714 = vunpack.c.h.b16 %v116
    %v715 = vunpack.c.l.b16 %v117
    %v716 = vunpack.c.h.b16 %v117
    %v717 = vunpack.c.l.b16 %v118
    %v718 = vunpack.c.h.b16 %v118
    %v719 = vunpack.c.l.b16 %v119
    %v720 = vunpack.c.h.b16 %v119
    %v721 = vunpack.c.l.b16 %v120
    %v722 = vunpack.c.h.b16 %v120
    %v723 = vunpack.c.l.b16 %v121
    %v724 = vunpack.c.h.b16 %v121
    %v725 = vunpack.c.l.b16 %v122
    %v726 = vunpack.c.h.b16 %v122
    %v727 = vunpack.c.l.b16 %v123
    %v728 = vunpack.c.h.b16 %v123
    %v729 = vunpack.c.l.b16 %v124
    %v730 = vunpack.c.h.b16 %v124
    %v731 = vunpack.c.l.b16 %v125
    %v732 = vunpack.c.h.b16 %v125
    %v733 = vunpack.c.l.b16 %v126
    %v734 = vunpack.c.h.b16 %v126
    %v735 = vunpack.c.l.b16 %v127
    %v736 = vunpack.c.h.b16 %v127
    %v737 = vunpack.c.l.b16 %v128
    %v738 = vunpack.c.h.b16 %v128
    %v739 = vunpack.c.l.b16 %v129
    %v740 = vunpack.c.h.b16 %v129
    %v741 = vunpack.c.l.b16 %v130
    %v742 = vunpack.c.h.b16 %v130
    %v743 = vunpack.c.l.b16 %v131
    %v744 = vunpack.c.h.b16 %v131
    %v745 = vunpack.c.l.b16 %v132
    %v746 = vunpack.c.h.b16 %v132
    %v747 = vunpack.c.l.b16 %v133
    %v748 = vunpack.c.h.b16 %v133
    %v749 = vunpack.c.l.b16 %v134
    %v750 = vunpack.c.h.b16 %v134
    %v751 = vunpack.c.l.b16 %v135
    %v752 = vunpack.c.h.b16 %v135
    %v753 = vunpack.c.l.b16 %v136
    %v754 = vunpack.c.h.b16 %v136
    %v755 = vunpack.c.l.b16 %v137
    %v756 = vunpack.c.h.b16 %v137
    %v757 = vunpack.c.l.b16 %v138
    %v758 = vunpack.c.h.b16 %v138
    %v759 = vunpack.c.l.b16 %v139
    %v760 = vunpack.c.h.b16 %v139
    %v761 = vunpack.c.l.b16 %v140
    %v762 = vunpack.c.h.b16 %v140
    %v763 = vunpack.c.l.b16 %v141
    %v764 = vunpack.c.h.b16 %v141
    %v765 = vunpack.c.l.b16 %v142
    %v766 = vunpack.c.h.b16 %v142
    %v767 = vunpack.c.l.b16 %v143
    %v768 = vunpack.c.h.b16 %v143
    %v769 = vunpack.c.l.b16 %v144
    %v770 = vunpack.c.h.b16 %v144
    %v771 = vunpack.c.l.b16 %v145
    %v772 = vunpack.c.h.b16 %v145
    %v773 = vunpack.c.l.b16 %v146
    %v774 = vunpack.c.h.b16 %v146
    %v775 = vunpack.c.l.b16 %v147
    %v776 = vunpack.c.h.b16 %v147
    %v777 = vunpack.c.l.b16 %v148
    %v778 = vunpack.c.h.b16 %v148
    %v779 = vunpack.c.l.b16 %v149
    %v780 = vunpack.c.h.b16 %v149
    %v781 = vunpack.c.l.b16 %v150
    %v782 = vunpack.c.h.b16 %v150
    %v783 = vunpack.c.l.b16 %v151
    %v784 = vunpack.c.h.b16 %v151
    %v785 = vunpack.c.l.b16 %v152
    %v786 = vunpack.c.h.b16 %v152
    %v787 = vunpack.c.l.b16 %v153
    %v788 = vunpack.c.h.b16 %v153
    %v789 = vunpack.c.l.b16 %v154
    %v790 = vunpack.c.h.b16 %v154
    %v791 = vunpack.c.l.b16 %v155
    %v792 = vunpack.c.h.b16 %v155
    %v793 = vunpack.c.l.b16 %v156
    %v794 = vunpack.c.h.b16 %v156
    %v795 = vunpack.c.l.b16 %v157
    %v796 = vunpack.c.h.b16 %v157
    %v797 = vunpack.c.l.b16 %v158
    %v798 = vunpack.c.h.b16 %v158
    %v799 = vunpack.c.l.b16 %v159
    %v800 = vunpack.c.h.b16 %v159
    %v801 = vunpack.c.l.b16 %v160
    %v802 = vunpack.c.h.b16 %v160
    %v803 = vunpack.c.l.b16 %v161
    %v804 = vunpack.c.h.b16 %v161
    %v805 = vunpack.c.l.b16 %v162
    %v806 = vunpack.c.h.b16 %v162
    %v807 = vunpack.c.l.b16 %v163
    %v808 = vunpack.c.h.b16 %v163
    %v809 = vunpack.c.l.b16 %v164
    %v810 = vunpack.c.h.b16 %v164
    %v811 = vunpack.c.l.b16 %v165
    %v812 = vunpack.c.h.b16 %v165
    %v813 = vunpack.c.l.b16 %v166
    %v814 = vunpack.c.h.b16 %v166
    %v815 = vunpack.c.l.b16 %v167
    %v816 = vunpack.c.h.b16 %v167
    %v817 = vunpack.c.l.b16 %v168
    %v818 = vunpack.c.h.b16 %v168
    %v819 = vunpack.c.l.b16 %v169
    %v820 = vunpack.c.h.b16 %v169
    %v821 = vunpack.c.l.b16 %v170
    %v822 = vunpack.c.h.b16 %v170
    %v823 = vunpack.c.l.b16 %v171
    %v824 = vunpack.c.h.b16 %v171
    %v825 = vunpack.c.l.b16 %v172
    %v826 = vunpack.c.h.b16 %v172
    %v827 = vunpack.c.l.b16 %v173
    %v828 = vunpack.c.h.b16 %v173
    %v829 = vunpack.c.l.b16 %v174
    %v830 = vunpack.c.h.b16 %v174
    %v831 = vunpack.c.l.b16 %v175
    %v832 = vunpack.c.h.b16 %v175
    %v833 = vunpack.c.l.b16 %v176
    %v834 = vunpack.c.h.b16 %v176
    %v835 = vunpack.c.l.b16 %v177
    %v836 = vunpack.c.h.b16 %v177
    %v837 = vunpack.c.l.b16 %v178
    %v838 = vunpack.c.h.b16 %v178
    %v839 = vunpack.c.l.b16 %v179
    %v840 = vunpack.c.h.b16 %v179
    %v841 = vunpack.c.l.b16 %v180
    %v842 = vunpack.c.h.b16 %v180
    %v843 = vunpack.c.l.b16 %v181
    %v844 = vunpack.c.h.b16 %v181
    %v845 = vunpack.c.l.b16 %v182
    %v846 = vunpack.c.h.b16 %v182
    %v847 = vunpack.c.l.b16 %v183
    %v848 = vunpack.c.h.b16 %v183
    %v849 = vunpack.c.l.b16 %v184
    %v850 = vunpack.c.h.b16 %v184
    %v851 = vunpack.c.l.b16 %v185
    %v852 = vunpack.c.h.b16 %v185
    %v853 = vunpack.c.l.b16 %v186
    %v854 = vunpack.c.h.b16 %v186
    %v855 = vunpack.c.l.b16 %v187
    %v856 = vunpack.c.h.b16 %v187
    %v857 = vunpack.c.l.b16 %v188
    %v858 = vunpack.c.h.b16 %v188
    %v859 = vunpack.c.l.b16 %v189
    %v860 = vunpack.c.h.b16 %v189
    %v861 = vunpack.c.l.b16 %v190
    %v862 = vunpack.c.h.b16 %v190
    %v863 = vunpack.c.l.b16 %v191
    %v864 = vunpack.c.h.b16 %v191
    %v865 = vunpack.c.l.b16 %v192
    %v866 = vunpack.c.h.b16 %v192
    %v867 = vunpack.c.l.b16 %v193
    %v868 = vunpack.c.h.b16 %v193
    %v869 = vunpack.c.l.b16 %v194
    %v870 = vunpack.c.h.b16 %v194
    %v871 = vunpack.c.l.b16 %v195
    %v872 = vunpack.c.h.b16 %v195
    %v873 = vunpack.c.l.b16 %v196
    %v874 = vunpack.c.h.b16 %v196
    %v875 = vunpack.c.l.b16 %v197
    %v876 = vunpack.c.h.b16 %v197
    %v877 = vunpack.c.l.b16 %v198
    %v878 = vunpack.c.h.b16 %v198
    %v879 = vunpack.c.l.b16 %v199
    %v880 = vunpack.c.h.b16 %v199
    %v881 = vunpack.c.l.b16 %v200
    %v882 = vunpack.c.h.b16 %v200
    %v883 = vunpack.c.l.b16 %v201
    %v884 = vunpack.c.h.b16 %v201
    %v885 = vunpack.c.l.b16 %v202
    %v886 = vunpack.c.h.b16 %v202
    %v887 = vunpack.c.l.b16 %v203
    %v888 = vunpack.c.h.b16 %v203
    %v889 = vunpack.c.l.b16 %v204
    %v890 = vunpack.c.h.b16 %v204
    %v891 = vunpack.c.l.b16 %v205
    %v892 = vunpack.c.h.b16 %v205
    %v893 = vunpack.c.l.b16 %v206
    %v894 = vunpack.c.h.b16 %v206
    %v895 = vunpack.c.l.b16 %v207
    %v896 = vunpack.c.h.b16 %v207
    %v897 = vunpack.c.l.b16 %v208
    %v898 = vunpack.c.h.b16 %v208
    %v899 = vunpack.c.l.b16 %v209
    %v900 = vunpack.c.h.b16 %v209
    %v901 = vunpack.c.l.b16 %v210
    %v902 = vunpack.c.h.b16 %v210
    %v903 = vunpack.c.l.b16 %v211
    %v904 = vunpack.c.h.b16 %v211
    %v905 = vunpack.c.l.b16 %v212
    %v906 = vunpack.c.h.b16 %v212
    %v907 = vunpack.c.l.b16 %v213
    %v908 = vunpack.c.h.b16 %v213
    %v909 = vunpack.c.l.b16 %v214
    %v910 = vunpack.c.h.b16 %v214
    %v911 = vunpack.c.l.b16 %v215
    %v912 = vunpack.c.h.b16 %v215
    %v913 = vunpack.c.l.b16 %v216
    %v914 = vunpack.c.h.b16 %v216
    %v915 = vunpack.c.l.b16 %v217
    %v916 = vunpack.c.h.b16 %v217
    %v917 = vunpack.c.l.b16 %v218
    %v918 = vunpack.c.h.b16 %v218
    %v919 = vunpack.c.l.b16 %v219
    %v920 = vunpack.c.h.b16 %v219
    %v921 = vunpack.c.l.b16 %v220
    %v922 = vunpack.c.h.b16 %v220
    %v923 = vunpack.c.l.b16 %v221
    %v924 = vunpack.c.h.b16 %v221
    %v925 = vunpack.c.l.b16 %v222
    %v926 = vunpack.c.h.b16 %v222
    %v927 = vunpack.c.l.b16 %v223
    %v928 = vunpack.c.h.b16 %v223
    %v929 = vunpack.c.l.b16 %v224
    %v930 = vunpack.c.h.b16 %v224
    %v931 = vunpack.c.l.b16 %v225
    %v932 = vunpack.c.h.b16 %v225
    %v933 = vunpack.c.l.b16 %v226
    %v934 = vunpack.c.h.b16 %v226
    %v935 = vunpack.c.l.b16 %v227
    %v936 = vunpack.c.h.b16 %v227
    %v937 = vunpack.c.l.b16 %v228
    %v938 = vunpack.c.h.b16 %v228
    %v939 = vunpack.c.l.b16 %v229
    %v940 = vunpack.c.h.b16 %v229
    %v941 = vunpack.c.l.b16 %v230
    %v942 = vunpack.c.h.b16 %v230
    %v943 = vunpack.c.l.b16 %v231
    %v944 = vunpack.c.h.b16 %v231
    %v945 = vunpack.c.l.b16 %v232
    %v946 = vunpack.c.h.b16 %v232
    %v947 = vunpack.c.l.b16 %v233
    %v948 = vunpack.c.h.b16 %v233
    %v949 = vunpack.c.l.b16 %v234
    %v950 = vunpack.c.h.b16 %v234
    %v951 = vunpack.c.l.b16 %v235
    %v952 = vunpack.c.h.b16 %v235
    %v953 = vunpack.c.l.b16 %v236
    %v954 = vunpack.c.h.b16 %v236
    %v955 = vunpack.c.l.b16 %v237
    %v956 = vunpack.c.h.b16 %v237
    %v957 = vunpack.c.l.b16 %v238
    %v958 = vunpack.c.h.b16 %v238
    %v959 = vunpack.c.l.b16 %v239
    %v960 = vunpack.c.h.b16 %v239
    %v961 = vunpack.c.l.b16 %v240
    %v962 = vunpack.c.h.b16 %v240
    %v963 = vunpack.c.l.b16 %v241
    %v964 = vunpack.c.h.b16 %v241
    %v965 = vunpack.c.l.b16 %v242
    %v966 = vunpack.c.h.b16 %v242
    %v967 = vunpack.c.l.b16 %v243
    %v968 = vunpack.c.h.b16 %v243
    %v969 = vunpack.c.l.b16 %v244
    %v970 = vunpack.c.h.b16 %v244
    %v971 = vunpack.c.l.b16 %v245
    %v972 = vunpack.c.h.b16 %v245
    %v973 = vunpack.c.l.b16 %v246
    %v974 = vunpack.c.h.b16 %v246
    %v975 = vunpack.c.l.b16 %v247
    %v976 = vunpack.c.h.b16 %v247
    %v977 = vunpack.c.l.b16 %v248
    %v978 = vunpack.c.h.b16 %v248
    %v979 = vunpack.c.l.b16 %v249
    %v980 = vunpack.c.h.b16 %v249
    %v981 = vunpack.c.l.b16 %v250
    %v982 = vunpack.c.h.b16 %v250
    %v983 = vunpack.c.l.b16 %v251
    %v984 = vunpack.c.h.b16 %v251
    %v985 = vunpack.c.l.b16 %v252
    %v986 = vunpack.c.h.b16 %v252
    %v987 = vunpack.c.l.b16 %v253
    %v988 = vunpack.c.h.b16 %v253
    %v989 = vunpack.c.l.b16 %v254
    %v990 = vunpack.c.h.b16 %v254
    %v991 = vunpack.c.l.b16 %v255
    %v992 = vunpack.c.h.b16 %v255
    %v993 = vunpack.c.l.b16 %v256
    %v994 = vunpack.c.h.b16 %v256
    %v995 = vunpack.c.l.b16 %v257
    %v996 = vunpack.c.h.b16 %v257
    %v997 = vunpack.c.l.b16 %v258
    %v998 = vunpack.c.h.b16 %v258
    %v999 = vunpack.c.l.b16 %v259
    %v1000 = vunpack.c.h.b16 %v259
    %v1001 = vunpack.c.l.b16 %v260
    %v1002 = vunpack.c.h.b16 %v260
    %v1003 = vunpack.c.l.b16 %v261
    %v1004 = vunpack.c.h.b16 %v261
    %v1005 = vunpack.c.l.b16 %v262
    %v1006 = vunpack.c.h.b16 %v262
    %v1007 = vunpack.c.l.b16 %v263
    %v1008 = vunpack.c.h.b16 %v263
    %v1009 = vunpack.c.l.b16 %v264
    %v1010 = vunpack.c.h.b16 %v264
    %v1011 = vunpack.c.l.b16 %v265
    %v1012 = vunpack.c.h.b16 %v265
    %v1013 = vunpack.c.l.b16 %v266
    %v1014 = vunpack.c.h.b16 %v266
    %v1015 = vunpack.c.l.b16 %v267
    %v1016 = vunpack.c.h.b16 %v267
    %v1017 = vunpack.c.l.b16 %v268
    %v1018 = vunpack.c.h.b16 %v268
    %v1019 = vunpack.c.l.b16 %v269
    %v1020 = vunpack.c.h.b16 %v269
    %v1021 = vunpack.c.l.b16 %v270
    %v1022 = vunpack.c.h.b16 %v270
    %v1023 = vunpack.c.l.b16 %v271
    %v1024 = vunpack.c.h.b16 %v271
    %v1025 = vunpack.c.l.b16 %v272
    %v1026 = vunpack.c.h.b16 %v272
    %v1027 = vunpack.c.l.b16 %v273
    %v1028 = vunpack.c.h.b16 %v273
    %v1029 = vunpack.c.l.b16 %v274
    %v1030 = vunpack.c.h.b16 %v274
    %v1031 = vunpack.c.l.b16 %v275
    %v1032 = vunpack.c.h.b16 %v275
    %v1033 = vunpack.c.l.b16 %v276
    %v1034 = vunpack.c.h.b16 %v276
    %v1035 = vunpack.c.l.b16 %v277
    %v1036 = vunpack.c.h.b16 %v277
    %v1037 = vunpack.c.l.b16 %v278
    %v1038 = vunpack.c.h.b16 %v278
    %v1039 = vunpack.c.l.b16 %v279
    %v1040 = vunpack.c.h.b16 %v279
    %v1041 = vunpack.c.l.b16 %v280
    %v1042 = vunpack.c.h.b16 %v280
    %v1043 = vunpack.c.l.b16 %v281
    %v1044 = vunpack.c.h.b16 %v281
    %v1045 = vunpack.c.l.b16 %v282
    %v1046 = vunpack.c.h.b16 %v282
    %v1047 = vunpack.c.l.b16 %v283
    %v1048 = vunpack.c.h.b16 %v283
    %v1049 = vunpack.c.l.b16 %v284
    %v1050 = vunpack.c.h.b16 %v284
    %v1051 = vunpack.c.l.b16 %v285
    %v1052 = vunpack.c.h.b16 %v285
    %v1053 = vunpack.c.l.b16 %v286
    %v1054 = vunpack.c.h.b16 %v286
    %v1055 = vunpack.c.l.b16 %v287
    %v1056 = vunpack.c.h.b16 %v287
    %v1057 = vunpack.c.l.b16 %v288
    %v1058 = vunpack.c.h.b16 %v288
    %v1059 = vunpack.c.l.b16 %v289
    %v1060 = vunpack.c.h.b16 %v289
    %v1061 = vunpack.c.l.b16 %v290
    %v1062 = vunpack.c.h.b16 %v290
    %v1063 = vunpack.c.l.b16 %v291
    %v1064 = vunpack.c.h.b16 %v291
    %v1065 = vunpack.c.l.b16 %v292
    %v1066 = vunpack.c.h.b16 %v292
    %v1067 = vunpack.c.l.b16 %v293
    %v1068 = vunpack.c.h.b16 %v293
    %v1069 = vunpack.c.l.b16 %v294
    %v1070 = vunpack.c.h.b16 %v294
    %v1071 = vunpack.c.l.b16 %v295
    %v1072 = vunpack.c.h.b16 %v295
    %v1073 = vunpack.c.l.b16 %v296
    %v1074 = vunpack.c.h.b16 %v296
    %v1075 = vunpack.c.l.b16 %v297
    %v1076 = vunpack.c.h.b16 %v297
    %v1077 = vunpack.c.l.b16 %v298
    %v1078 = vunpack.c.h.b16 %v298
    %v1079 = vunpack.c.l.b16 %v299
    %v1080 = vunpack.c.h.b16 %v299
    %v1081 = vunpack.c.l.b16 %v300
    %v1082 = vunpack.c.h.b16 %v300
    %v1083 = vunpack.c.l.b16 %v301
    %v1084 = vunpack.c.h.b16 %v301
    %v1085 = vunpack.c.l.b16 %v302
    %v1086 = vunpack.c.h.b16 %v302
    %v1087 = vunpack.c.l.b16 %v303
    %v1088 = vunpack.c.h.b16 %v303
    %v1089 = vunpack.c.l.b16 %v304
    %v1090 = vunpack.c.h.b16 %v304
    %v1091 = vunpack.c.l.b16 %v305
    %v1092 = vunpack.c.h.b16 %v305
    %v1093 = vunpack.c.l.b16 %v306
    %v1094 = vunpack.c.h.b16 %v306
    %v1095 = vunpack.c.l.b16 %v307
    %v1096 = vunpack.c.h.b16 %v307
    %v1097 = vunpack.c.l.b16 %v308
    %v1098 = vunpack.c.h.b16 %v308
    %v1099 = vunpack.c.l.b16 %v309
    %v1100 = vunpack.c.h.b16 %v309
    %v1101 = vunpack.c.l.b16 %v310
    %v1102 = vunpack.c.h.b16 %v310
    %v1103 = vunpack.c.l.b16 %v311
    %v1104 = vunpack.c.h.b16 %v311
    %v1105 = vunpack.c.l.b16 %v312
    %v1106 = vunpack.c.h.b16 %v312
    %v1107 = vunpack.c.l.b16 %v313
    %v1108 = vunpack.c.h.b16 %v313
    %v1109 = vunpack.c.l.b16 %v314
    %v1110 = vunpack.c.h.b16 %v314
    %v1111 = vunpack.c.l.b16 %v315
    %v1112 = vunpack.c.h.b16 %v315
    %v1113 = vunpack.c.l.b16 %v316
    %v1114 = vunpack.c.h.b16 %v316
    %v1115 = vunpack.c.l.b16 %v317
    %v1116 = vunpack.c.h.b16 %v317
    %v1117 = vunpack.c.l.b16 %v318
    %v1118 = vunpack.c.h.b16 %v318
    %v1119 = vunpack.c.l.b16 %v319
    %v1120 = vunpack.c.h.b16 %v319
    %v1121 = vunpack.c.l.b16 %v320
    %v1122 = vunpack.c.h.b16 %v320
    %v1123 = vunpack.c.l.b16 %v321
    %v1124 = vunpack.c.h.b16 %v321
    %v1125 = vunpack.c.l.b16 %v322
    %v1126 = vunpack.c.h.b16 %v322
    %v1127 = vunpack.c.l.b16 %v323
    %v1128 = vunpack.c.h.b16 %v323
    %v1129 = vunpack.c.l.b16 %v324
    %v1130 = vunpack.c.h.b16 %v324
    %v1131 = vunpack.c.l.b16 %v325
    %v1132 = vunpack.c.h.b16 %v325
    %v1133 = vunpack.c.l.b16 %v326
    %v1134 = vunpack.c.h.b16 %v326
    %v1135 = vunpack.c.l.b16 %v327
    %v1136 = vunpack.c.h.b16 %v327
    %v1137 = vunpack.c.l.b16 %v328
    %v1138 = vunpack.c.h.b16 %v328
    %v1139 = vunpack.c.l.b16 %v329
    %v1140 = vunpack.c.h.b16 %v329
    %v1141 = vunpack.c.l.b16 %v330
    %v1142 = vunpack.c.h.b16 %v330
    %v1143 = vunpack.c.l.b16 %v331
    %v1144 = vunpack.c.h.b16 %v331
    %v1145 = vunpack.c.l.b16 %v332
    %v1146 = vunpack.c.h.b16 %v332
    %v1147 = vunpack.c.l.b16 %v333
    %v1148 = vunpack.c.h.b16 %v333
    %v1149 = vunpack.c.l.b16 %v334
    %v1150 = vunpack.c.h.b16 %v334
    %v1151 = vunpack.c.l.b16 %v335
    %v1152 = vunpack.c.h.b16 %v335
    %v1153 = vunpack.c.l.b16 %v336
    %v1154 = vunpack.c.h.b16 %v336
    %v1155 = vunpack.c.l.b16 %v337
    %v1156 = vunpack.c.h.b16 %v337
    %v1157 = vunpack.c.l.b16 %v338
    %v1158 = vunpack.c.h.b16 %v338
    %v1159 = vunpack.c.l.b16 %v339
    %v1160 = vunpack.c.h.b16 %v339
    %v1161 = vunpack.c.l.b16 %v340
    %v1162 = vunpack.c.h.b16 %v340
    %v1163 = vunpack.c.l.b16 %v341
    %v1164 = vunpack.c.h.b16 %v341
    %v1165 = vunpack.c.l.b16 %v342
    %v1166 = vunpack.c.h.b16 %v342
    %v1167 = vunpack.c.l.b16 %v343
    %v1168 = vunpack.c.h.b16 %v343
    %v1169 = vunpack.c.l.b16 %v344
    %v1170 = vunpack.c.h.b16 %v344
    %v1171 = vunpack.c.l.b16 %v345
    %v1172 = vunpack.c.h.b16 %v345
    %v1173 = vunpack.c.l.b16 %v346
    %v1174 = vunpack.c.h.b16 %v346
    %v1175 = vunpack.c.l.b16 %v347
    %v1176 = vunpack.c.h.b16 %v347
    %v1177 = vunpack.c.l.b16 %v348
    %v1178 = vunpack.c.h.b16 %v348
    %v1179 = vunpack.c.l.b16 %v349
    %v1180 = vunpack.c.h.b16 %v349
    %v1181 = vunpack.c.l.b16 %v350
    %v1182 = vunpack.c.h.b16 %v350
    %v1183 = vunpack.c.l.b16 %v351
    %v1184 = vunpack.c.h.b16 %v351
    %v1185 = vunpack.c.l.b16 %v352
    %v1186 = vunpack.c.h.b16 %v352
    %v1187 = vunpack.c.l.b16 %v353
    %v1188 = vunpack.c.h.b16 %v353
    %v1189 = vunpack.c.l.b16 %v354
    %v1190 = vunpack.c.h.b16 %v354
    %v1191 = vunpack.c.l.b16 %v355
    %v1192 = vunpack.c.h.b16 %v355
    %v1193 = vunpack.c.l.b16 %v356
    %v1194 = vunpack.c.h.b16 %v356
    %v1195 = vunpack.c.l.b16 %v357
    %v1196 = vunpack.c.h.b16 %v357
    %v1197 = vunpack.c.l.b16 %v358
    %v1198 = vunpack.c.h.b16 %v358
    %v1199 = vunpack.c.l.b16 %v359
    %v1200 = vunpack.c.h.b16 %v359
    %v1201 = vunpack.c.l.b16 %v360
    %v1202 = vunpack.c.h.b16 %v360
    %v1203 = vunpack.c.l.b16 %v361
    %v1204 = vunpack.c.h.b16 %v361
    %v1205 = vunpack.c.l.b16 %v362
    %v1206 = vunpack.c.h.b16 %v362
    %v1207 = vunpack.c.l.b16 %v363
    %v1208 = vunpack.c.h.b16 %v363
    %v1209 = vunpack.c.l.b16 %v364
    %v1210 = vunpack.c.h.b16 %v364
    %v1211 = vunpack.c.l.b16 %v365
    %v1212 = vunpack.c.h.b16 %v365
    %v1213 = vpack.c.b16 %v705, %v701
    %v1214 = vpack.c.b16 %v706, %v702
    %v1215 = vpack.c.b16 %v707, %v703
    %v1216 = vpack.c.b16 %v708, %v704
    %v1217 = vpack.c.b16 %v713, %v709
    %v1218 = vpack.c.b16 %v714, %v710
    %v1219 = vpack.c.b16 %v715, %v711
    %v1220 = vpack.c.b16 %v716, %v712
    %v1221 = vpack.c.b16 %v721, %v717
    %v1222 = vpack.c.b16 %v722, %v718
    %v1223 = vpack.c.b16 %v723, %v719
    %v1224 = vpack.c.b16 %v724, %v720
    %v1225 = vpack.c.b16 %v729, %v725
    %v1226 = vpack.c.b16 %v730, %v726
    %v1227 = vpack.c.b16 %v731, %v727
    %v1228 = vpack.c.b16 %v732, %v728
    %v1229 = vpack.c.b16 %v737, %v733
    %v1230 = vpack.c.b16 %v738, %v734
    %v1231 = vpack.c.b16 %v739, %v735
    %v1232 = vpack.c.b16 %v740, %v736
    %v1233 = vpack.c.b16 %v745, %v741
    %v1234 = vpack.c.b16 %v746, %v742
    %v1235 = vpack.c.b16 %v747, %v743
    %v1236 = vpack.c.b16 %v748, %v744
    %v1237 = vpack.c.b16 %v753, %v749
    %v1238 = vpack.c.b16 %v754, %v750
    %v1239 = vpack.c.b16 %v755, %v751
    %v1240 = vpack.c.b16 %v756, %v752
    %v1241 = vpack.c.b16 %v761, %v757
    %v1242 = vpack.c.b16 %v762, %v758
    %v1243 = vpack.c.b16 %v763, %v759
    %v1244 = vpack.c.b16 %v764, %v760
    %v1245 = vpack.c.b16 %v769, %v765
    %v1246 = vpack.c.b16 %v770, %v766
    %v1247 = vpack.c.b16 %v771, %v767
    %v1248 = vpack.c.b16 %v772, %v768
    %v1249 = vpack.c.b16 %v777, %v773
    %v1250 = vpack.c.b16 %v778, %v774
    %v1251 = vpack.c.b16 %v779, %v775
    %v1252 = vpack.c.b16 %v780, %v776
    %v1253 = vpack.c.b16 %v785, %v781
    %v1254 = vpack.c.b16 %v786, %v782
    %v1255 = vpack.c.b16 %v787, %v783
    %v1256 = vpack.c.b16 %v788, %v784
    %v1257 = vpack.c.b16 %v793, %v789
    %v1258 = vpack.c.b16 %v794, %v790
    %v1259 = vpack.c.b16 %v795, %v791
    %v1260 = vpack.c.b16 %v796, %v792
    %v1261 = vpack.c.b16 %v801, %v797
    %v1262 = vpack.c.b16 %v802, %v798
    %v1263 = vpack.c.b16 %v803, %v799
    %v1264 = vpack.c.b16 %v804, %v800
    %v1265 = vpack.c.b16 %v809, %v805
    %v1266 = vpack.c.b16 %v810, %v806
    %v1267 = vpack.c.b16 %v811, %v807
    %v1268 = vpack.c.b16 %v812, %v808
    %v1269 = vpack.c.b16 %v817, %v813
    %v1270 = vpack.c.b16 %v818, %v814
    %v1271 = vpack.c.b16 %v819, %v815
    %v1272 = vpack.c.b16 %v820, %v816
    %v1273 = vpack.c.b16 %v825, %v821
    %v1274 = vpack.c.b16 %v826, %v822
    %v1275 = vpack.c.b16 %v827, %v823
    %v1276 = vpack.c.b16 %v828, %v824
    %v1277 = vpack.c.b16 %v833, %v829
    %v1278 = vpack.c.b16 %v834, %v830
    %v1279 = vpack.c.b16 %v835, %v831
    %v1280 = vpack.c.b16 %v836, %v832
    %v1281 = vpack.c.b16 %v841, %v837
    %v1282 = vpack.c.b16 %v842, %v838
    %v1283 = vpack.c.b16 %v843, %v839
    %v1284 = vpack.c.b16 %v844, %v840
    %v1285 = vpack.c.b16 %v849, %v845
    %v1286 = vpack.c.b16 %v850, %v846
    %v1287 = vpack.c.b16 %v851, %v847
    %v1288 = vpack.c.b16 %v852, %v848
    %v1289 = vpack.c.b16 %v857, %v853
    %v1290 = vpack.c.b16 %v858, %v854
    %v1291 = vpack.c.b16 %v859, %v855
    %v1292 = vpack.c.b16 %v860, %v856
    %v1293 = vpack.c.b16 %v865, %v861
    %v1294 = vpack.c.b16 %v866, %v862
    %v1295 = vpack.c.b16 %v867, %v863
    %v1296 = vpack.c.b16 %v868, %v864
    %v1297 = vpack.c.b16 %v873, %v869
    %v1298 = vpack.c.b16 %v874, %v870
    %v1299 = vpack.c.b16 %v875, %v871
    %v1300 = vpack.c.b16 %v876, %v872
    %v1301 = vpack.c.b16 %v881, %v877
    %v1302 = vpack.c.b16 %v882, %v878
    %v1303 = vpack.c.b16 %v883, %v879
    %v1304 = vpack.c.b16 %v884, %v880
    %v1305 = vpack.c.b16 %v889, %v885
    %v1306 = vpack.c.b16 %v890, %v886
    %v1307 = vpack.c.b16 %v891, %v887
    %v1308 = vpack.c.b16 %v892, %v888
    %v1309 = vpack.c.b16 %v897, %v893
    %v1310 = vpack.c.b16 %v898, %v894
    %v1311 = vpack.c.b16 %v899, %v895
    %v1312 = vpack.c.b16 %v900, %v896
    %v1313 = vpack.c.b16 %v905, %v901
    %v1314 = vpack.c.b16 %v906, %v902
    %v1315 = vpack.c.b16 %v907, %v903
    %v1316 = vpack.c.b16 %v908, %v904
    %v1317 = vpack.c.b16 %v913, %v909
    %v1318 = vpack.c.b16 %v914, %v910
    %v1319 = vpack.c.b16 %v915, %v911
    %v1320 = vpack.c.b16 %v916, %v912
    %v1321 = vpack.c.b16 %v921, %v917
    %v1322 = vpack.c.b16 %v922, %v918
    %v1323 = vpack.c.b16 %v923, %v919
    %v1324 = vpack.c.b16 %v924, %v920
    %v1325 = vpack.c.b16 %v929, %v925
    %v1326 = vpack.c.b16 %v930, %v926
    %v1327 = vpack.c.b16 %v931, %v927
    %v1328 = vpack.c.b16 %v932, %v928
    %v1329 = vpack.c.b16 %v937, %v933
    %v1330 = vpack.c.b16 %v938, %v934
    %v1331 = vpack.c.b16 %v939, %v935
    %v1332 = vpack.c.b16 %v940, %v936
    %v1333 = vpack.c.b16 %v945, %v941
    %v1334 = vpack.c.b16 %v946, %v942
    %v1335 = vpack.c.b16 %v947, %v943
    %v1336 = vpack.c.b16 %v948, %v944
    %v1337 = vpack.c.b16 %v953, %v949
    %v1338 = vpack.c.b16 %v954, %v950
    %v1339 = vpack.c.b16 %v955, %v951
    %v1340 = vpack.c.b16 %v956, %v952
    %v1341 = vpack.c.b16 %v961, %v957
    %v1342 = vpack.c.b16 %v962, %v958
    %v1343 = vpack.c.b16 %v963, %v959
    %v1344 = vpack.c.b16 %v964, %v960
    %v1345 = vpack.c.b16 %v969, %v965
    %v1346 = vpack.c.b16 %v970, %v966
    %v1347 = vpack.c.b16 %v971, %v967
    %v1348 = vpack.c.b16 %v972, %v968
    %v1349 = vpack.c.b16 %v977, %v973
    %v1350 = vpack.c.b16 %v978, %v974
    %v1351 = vpack.c.b16 %v979, %v975
    %v1352 = vpack.c.b16 %v980, %v976
    %v1353 = vpack.c.b16 %v985, %v981
    %v1354 = vpack.c.b16 %v986, %v982
    %v1355 = vpack.c.b16 %v987, %v983
    %v1356 = vpack.c.b16 %v988, %v984
    %v1357 = vpack.c.b16 %v993, %v989
    %v1358 = vpack.c.b16 %v994, %v990
    %v1359 = vpack.c.b16 %v995, %v991
    %v1360 = vpack.c.b16 %v996, %v992
    %v1361 = vpack.c.b16 %v1001, %v997
    %v1362 = vpack.c.b16 %v1002, %v998
    %v1363 = vpack.c.b16 %v1003, %v999
    %v1364 = vpack.c.b16 %v1004, %v1000
    %v1365 = vpack.c.b16 %v1009, %v1005
    %v1366 = vpack.c.b16 %v1010, %v1006
    %v1367 = vpack.c.b16 %v1011, %v1007
    %v1368 = vpack.c.b16 %v1012, %v1008
    %v1369 = vpack.c.b16 %v1017, %v1013
    %v1370 = vpack.c.b16 %v1018, %v1014
    %v1371 = vpack.c.b16 %v1019, %v1015
    %v1372 = vpack.c.b16 %v1020, %v1016
    %v1373 = vpack.c.b16 %v1025, %v1021
    %v1374 = vpack.c.b16 %v1026, %v1022
    %v1375 = vpack.c.b16 %v1027, %v1023
    %v1376 = vpack.c.b16 %v1028, %v1024
    %v1377 = vpack.c.b16 %v1033, %v1029
    %v1378 = vpack.c.b16 %v1034, %v1030
    %v1379 = vpack.c.b16 %v1035, %v1031
    %v1380 = vpack.c.b16 %v1036, %v1032
    %v1381 = vpack.c.b16 %v1041, %v1037
    %v1382 = vpack.c.b16 %v1042, %v1038
    %v1383 = vpack.c.b16 %v1043, %v1039
    %v1384 = vpack.c.b16 %v1044, %v1040
    %v1385 = vpack.c.b16 %v1049, %v1045
    %v1386 = vpack.c.b16 %v1050, %v1046
    %v1387 = vpack.c.b16 %v1051, %v1047
    %v1388 = vpack.c.b16 %v1052, %v1048
    %v1389 = vpack.c.b16 %v1057, %v1053
    %v1390 = vpack.c.b16 %v1058, %v1054
    %v1391 = vpack.c.b16 %v1059, %v1055
    %v1392 = vpack.c.b16 %v1060, %v1056
    %v1393 = vpack.c.b16 %v1065, %v1061
    %v1394 = vpack.c.b16 %v1066, %v1062
    %v1395 = vpack.c.b16 %v1067, %v1063
    %v1396 = vpack.c.b16 %v1068, %v1064
    %v1397 = vpack.c.b16 %v1073, %v1069
    %v1398 = vpack.c.b16 %v1074, %v1070
    %v1399 = vpack.c.b16 %v1075, %v1071
    %v1400 = vpack.c.b16 %v1076, %v1072
    %v1401 = vpack.c.b16 %v1081, %v1077
    %v1402 = vpack.c.b16 %v1082, %v1078
    %v1403 = vpack.c.b16 %v1083, %v1079
    %v1404 = vpack.c.b16 %v1084, %v1080
    %v1405 = vpack.c.b16 %v1089, %v1085
    %v1406 = vpack.c.b16 %v1090, %v1086
    %v1407 = vpack.c.b16 %v1091, %v1087
    %v1408 = vpack.c.b16 %v1092, %v1088
    %v1409 = vpack.c.b16 %v1097, %v1093
    %v1410 = vpack.c.b16 %v1098, %v1094
    %v1411 = vpack.c.b16 %v1099, %v1095
    %v1412 = vpack.c.b16 %v1100, %v1096
    %v1413 = vpack.c.b16 %v1105, %v1101
    %v1414 = vpack.c.b16 %v1106, %v1102
    %v1415 = vpack.c.b16 %v1107, %v1103
    %v1416 = vpack.c.b16 %v1108, %v1104
    %v1417 = vpack.c.b16 %v1113, %v1109
    %v1418 = vpack.c.b16 %v1114, %v1110
    %v1419 = vpack.c.b16 %v1115, %v1111
    %v1420 = vpack.c.b16 %v1116, %v1112
    %v1421 = vpack.c.b16 %v1121, %v1117
    %v1422 = vpack.c.b16 %v1122, %v1118
    %v1423 = vpack.c.b16 %v1123, %v1119
    %v1424 = vpack.c.b16 %v1124, %v1120
    %v1425 = vpack.c.b16 %v1129, %v1125
    %v1426 = vpack.c.b16 %v1130, %v1126
    %v1427 = vpack.c.b16 %v1131, %v1127
    %v1428 = vpack.c.b16 %v1132, %v1128
    %v1429 = vpack.c.b16 %v1137, %v1133
    %v1430 = vpack.c.b16 %v1138, %v1134
    %v1431 = vpack.c.b16 %v1139, %v1135
    %v1432 = vpack.c.b16 %v1140, %v1136
    %v1433 = vpack.c.b16 %v1145, %v1141
    %v1434 = vpack.c.b16 %v1146, %v1142
    %v1435 = vpack.c.b16 %v1147, %v1143
    %v1436 = vpack.c.b16 %v1148, %v1144
    %v1437 = vpack.c.b16 %v1153, %v1149
    %v1438 = vpack.c.b16 %v1154, %v1150
    %v1439 = vpack.c.b16 %v1155, %v1151
    %v1440 = vpack.c.b16 %v1156, %v1152
    %v1441 = vpack.c.b16 %v1161, %v1157
    %v1442 = vpack.c.b16 %v1162, %v1158
    %v1443 = vpack.c.b16 %v1163, %v1159
    %v1444 = vpack.c.b16 %v1164, %v1160
    %v1445 = vpack.c.b16 %v1169, %v1165
    %v1446 = vpack.c.b16 %v1170, %v1166
    %v1447 = vpack.c.b16 %v1171, %v1167
    %v1448 = vpack.c.b16 %v1172, %v1168
    %v1449 = vpack.c.b16 %v1177, %v1173
    %v1450 = vpack.c.b16 %v1178, %v1174
    %v1451 = vpack.c.b16 %v1179, %v1175
    %v1452 = vpack.c.b16 %v1180, %v1176
    %v1453 = vpack.c.b16 %v1185, %v1181
    %v1454 = vpack.c.b16 %v1186, %v1182
    %v1455 = vpack.c.b16 %v1187, %v1183
    %v1456 = vpack.c.b16 %v1188, %v1184
    %v1457 = vpack.c.b16 %v1193, %v1189
    %v1458 = vpack.c.b16 %v1194, %v1190
    %v1459 = vpack.c.b16 %v1195, %v1191
    %v1460 = vpack.c.b16 %v1196, %v1192
    %v1461 = vpack.c.b16 %v1201, %v1197
    %v1462 = vpack.c.b16 %v1202, %v1198
    %v1463 = vpack.c.b16 %v1203, %v1199
    %v1464 = vpack.c.b16 %v1204, %v1200
    %v1465 = vpack.c.b16 %v1209, %v1205
    %v1466 = vpack.c.b16 %v1210, %v1206
    %v1467 = vpack.c.b16 %v1211, %v1207
    %v1468 = vpack.c.b16 %v1212, %v1208
    %1725 = vmatprep.subr.bf16.mxu0 %v1214
    %1726 = vmatpush1.bf16.msra.mxu0 %v1213
    %1727 = vmatprep.subr.bf16.mxu0 %v1218
    %1728 = vmatpush1.bf16.msra.mxu0 %v1217
    %1729 = vmatprep.subr.bf16.mxu0 %v1222
    %1730 = vmatpush1.bf16.msra.mxu0 %v1221
    %1731 = vmatprep.subr.bf16.mxu0 %v1226
    %1732 = vmatpush1.bf16.msra.mxu0 %v1225
    %1733 = vmatprep.subr.bf16.mxu0 %v1230
    %1734 = vmatpush1.bf16.msra.mxu0 %v1229
    %1735 = vmatprep.subr.bf16.mxu0 %v1234
    %1736 = vmatpush1.bf16.msra.mxu0 %v1233
    %1737 = vmatprep.subr.bf16.mxu0 %v1238
    %1738 = vmatpush1.bf16.msra.mxu0 %v1237
    %1739 = vmatprep.subr.bf16.mxu0 %v1242
    %1740 = vmatpush1.bf16.msra.mxu0 %v1241
    %1741 = vmatprep.subr.bf16.mxu0 %v1246
    %1742 = vmatpush1.bf16.msra.mxu0 %v1245
    %1743 = vmatprep.subr.bf16.mxu0 %v1250
    %1744 = vmatpush1.bf16.msra.mxu0 %v1249
    %1745 = vmatprep.subr.bf16.mxu0 %v1254
    %1746 = vmatpush1.bf16.msra.mxu0 %v1253
    %1747 = vmatprep.subr.bf16.mxu0 %v1258
    %1748 = vmatpush1.bf16.msra.mxu0 %v1257
    %1749 = vmatprep.subr.bf16.mxu0 %v1262
    %1750 = vmatpush1.bf16.msra.mxu0 %v1261
    %1751 = vmatprep.subr.bf16.mxu0 %v1266
    %1752 = vmatpush1.bf16.msra.mxu0 %v1265
    %1753 = vmatprep.subr.bf16.mxu0 %v1270
    %1754 = vmatpush1.bf16.msra.mxu0 %v1269
    %1755 = vmatprep.subr.bf16.mxu0 %v1274
    %1756 = vmatpush1.bf16.msra.mxu0 %v1273
    %1757 = vmatprep.mubr.bf16.mxu0 %v425
    %1758 = vmatmul.mubr.bf16.gmra.mrb[0].mxu0 %v411
    %v1759 = vpop.f32.mrb[0].mxu0
    %v1760 = vadd.f32 %v370, %v1759
    %v1761 = vpop.f32.mrb[0].mxu0
    %v1762 = vadd.f32 %v374, %v1761
    %v1763 = vpop.f32.mrb[0].mxu0
    %v1764 = vpop.f32.mrb[0].mxu0
    %1765 = vdwg.mxu0
    %1766 = vmatprep.subr.bf16.mxu0 %v1278
    %1767 = vmatpush1.bf16.msra.mxu0 %v1277
    %1768 = vmatprep.subr.bf16.mxu0 %v1282
    %1769 = vmatpush1.bf16.msra.mxu0 %v1281
    %1770 = vmatprep.subr.bf16.mxu0 %v1286
    %1771 = vmatpush1.bf16.msra.mxu0 %v1285
    %1772 = vmatprep.subr.bf16.mxu0 %v1290
    %1773 = vmatpush1.bf16.msra.mxu0 %v1289
    %1774 = vmatprep.subr.bf16.mxu0 %v1294
    %1775 = vmatpush1.bf16.msra.mxu0 %v1293
    %1776 = vmatprep.subr.bf16.mxu0 %v1298
    %1777 = vmatpush1.bf16.msra.mxu0 %v1297
    %1778 = vmatprep.subr.bf16.mxu0 %v1302
    %1779 = vmatpush1.bf16.msra.mxu0 %v1301
    %1780 = vmatprep.subr.bf16.mxu0 %v1306
    %1781 = vmatpush1.bf16.msra.mxu0 %v1305
    %1782 = vmatprep.subr.bf16.mxu0 %v1310
    %1783 = vmatpush1.bf16.msra.mxu0 %v1309
    %1784 = vmatprep.subr.bf16.mxu0 %v1314
    %1785 = vmatpush1.bf16.msra.mxu0 %v1313
    %1786 = vmatprep.subr.bf16.mxu0 %v1318
    %1787 = vmatpush1.bf16.msra.mxu0 %v1317
    %1788 = vmatprep.subr.bf16.mxu0 %v1322
    %1789 = vmatpush1.bf16.msra.mxu0 %v1321
    %1790 = vmatprep.subr.bf16.mxu0 %v1326
    %1791 = vmatpush1.bf16.msra.mxu0 %v1325
    %1792 = vmatprep.subr.bf16.mxu0 %v1330
    %1793 = vmatpush1.bf16.msra.mxu0 %v1329
    %1794 = vmatprep.subr.bf16.mxu0 %v1334
    %1795 = vmatpush1.bf16.msra.mxu0 %v1333
    %1796 = vmatprep.subr.bf16.mxu0 %v1338
    %1797 = vmatpush1.bf16.msra.mxu0 %v1337
    %1798 = vmatprep.mubr.bf16.mxu0 %v435
    %1799 = vmatmul.mubr.bf16.gmra.mrb[0].mxu0 %v433
    %v1800 = vpop.f32.mrb[0].mxu0
    %v1801 = vadd.f32 %v1760, %v1800
    %v1802 = vpop.f32.mrb[0].mxu0
    %v1803 = vadd.f32 %v1762, %v1802
    %v1804 = vpop.f32.mrb[0].mxu0
    %v1805 = vpop.f32.mrb[0].mxu0
    %1806 = vdwg.mxu0
    %1807 = vmatprep.subr.bf16.mxu0 %v1342
    %1808 = vmatpush1.bf16.msra.mxu0 %v1341
    %1809 = vmatprep.subr.bf16.mxu0 %v1346
    %1810 = vmatpush1.bf16.msra.mxu0 %v1345
    %1811 = vmatprep.subr.bf16.mxu0 %v1350
    %1812 = vmatpush1.bf16.msra.mxu0 %v1349
    %1813 = vmatprep.subr.bf16.mxu0 %v1354
    %1814 = vmatpush1.bf16.msra.mxu0 %v1353
    %1815 = vmatprep.subr.bf16.mxu0 %v1358
    %1816 = vmatpush1.bf16.msra.mxu0 %v1357
    %1817 = vmatprep.subr.bf16.mxu0 %v1362
    %1818 = vmatpush1.bf16.msra.mxu0 %v1361
    %1819 = vmatprep.subr.bf16.mxu0 %v1366
    %1820 = vmatpush1.bf16.msra.mxu0 %v1365
    %1821 = vmatprep.subr.bf16.mxu0 %v1370
    %1822 = vmatpush1.bf16.msra.mxu0 %v1369
    %1823 = vmatprep.subr.bf16.mxu0 %v1374
    %1824 = vmatpush1.bf16.msra.mxu0 %v1373
    %1825 = vmatprep.subr.bf16.mxu0 %v1378
    %1826 = vmatpush1.bf16.msra.mxu0 %v1377
    %1827 = vmatprep.subr.bf16.mxu0 %v1382
    %1828 = vmatpush1.bf16.msra.mxu0 %v1381
    %1829 = vmatprep.subr.bf16.mxu0 %v1386
    %1830 = vmatpush1.bf16.msra.mxu0 %v1385
    %1831 = vmatprep.subr.bf16.mxu0 %v1390
    %1832 = vmatpush1.bf16.msra.mxu0 %v1389
    %1833 = vmatprep.subr.bf16.mxu0 %v1394
    %1834 = vmatpush1.bf16.msra.mxu0 %v1393
    %1835 = vmatprep.subr.bf16.mxu0 %v1398
    %1836 = vmatpush1.bf16.msra.mxu0 %v1397
    %1837 = vmatprep.subr.bf16.mxu0 %v1402
    %1838 = vmatpush1.bf16.msra.mxu0 %v1401
    %1839 = vmatprep.mubr.bf16.mxu0 %v432
    %1840 = vmatmul.mubr.bf16.gmra.mrb[0].mxu0 %v418
    %v1841 = vpop.f32.mrb[0].mxu0
    %v1842 = vadd.f32 %v1801, %v1841
    %v1843 = vpop.f32.mrb[0].mxu0
    %v1844 = vadd.f32 %v1803, %v1843
    %v1845 = vpop.f32.mrb[0].mxu0
    %v1846 = vpop.f32.mrb[0].mxu0
    %1847 = vdwg.mxu0
    %1848 = vmatprep.subr.bf16.mxu0 %v1406
    %1849 = vmatpush1.bf16.msra.mxu0 %v1405
    %1850 = vmatprep.subr.bf16.mxu0 %v1410
    %1851 = vmatpush1.bf16.msra.mxu0 %v1409
    %1852 = vmatprep.subr.bf16.mxu0 %v1414
    %1853 = vmatpush1.bf16.msra.mxu0 %v1413
    %1854 = vmatprep.subr.bf16.mxu0 %v1418
    %1855 = vmatpush1.bf16.msra.mxu0 %v1417
    %1856 = vmatprep.subr.bf16.mxu0 %v1422
    %1857 = vmatpush1.bf16.msra.mxu0 %v1421
    %1858 = vmatprep.subr.bf16.mxu0 %v1426
    %1859 = vmatpush1.bf16.msra.mxu0 %v1425
    %1860 = vmatprep.subr.bf16.mxu0 %v1430
    %1861 = vmatpush1.bf16.msra.mxu0 %v1429
    %1862 = vmatprep.subr.bf16.mxu0 %v1434
    %1863 = vmatpush1.bf16.msra.mxu0 %v1433
    %1864 = vmatprep.subr.bf16.mxu0 %v1438
    %1865 = vmatpush1.bf16.msra.mxu0 %v1437
    %1866 = vmatprep.subr.bf16.mxu0 %v1442
    %1867 = vmatpush1.bf16.msra.mxu0 %v1441
    %1868 = vmatprep.subr.bf16.mxu0 %v1446
    %1869 = vmatpush1.bf16.msra.mxu0 %v1445
    %1870 = vmatprep.subr.bf16.mxu0 %v1450
    %1871 = vmatpush1.bf16.msra.mxu0 %v1449
    %1872 = vmatprep.subr.bf16.mxu0 %v1454
    %1873 = vmatpush1.bf16.msra.mxu0 %v1453
    %1874 = vmatprep.subr.bf16.mxu0 %v1458
    %1875 = vmatpush1.bf16.msra.mxu0 %v1457
    %1876 = vmatprep.subr.bf16.mxu0 %v1462
    %1877 = vmatpush1.bf16.msra.mxu0 %v1461
    %1878 = vmatprep.subr.bf16.mxu0 %v1466
    %1879 = vmatpush1.bf16.msra.mxu0 %v1465
    %1880 = vmatprep.mubr.bf16.mxu0 %v436
    %1881 = vmatmul.mubr.bf16.gmra.mrb[0].mxu0 %v434
    %v1882 = vpop.f32.mrb[0].mxu0
    %v1883 = vadd.f32 %v1842, %v1882
    %v1884 = vpop.f32.mrb[0].mxu0
    %v1885 = vadd.f32 %v1844, %v1884
    %v1886 = vpop.f32.mrb[0].mxu0
    %v1887 = vpop.f32.mrb[0].mxu0
    %1888 = vdwg.mxu0
    %1889 = vmatprep.subr.bf16.mxu0 %v1216
    %1890 = vmatpush1.bf16.msra.mxu0 %v1215
    %1891 = vmatprep.subr.bf16.mxu0 %v1220
    %1892 = vmatpush1.bf16.msra.mxu0 %v1219
    %1893 = vmatprep.subr.bf16.mxu0 %v1224
    %1894 = vmatpush1.bf16.msra.mxu0 %v1223
    %1895 = vmatprep.subr.bf16.mxu0 %v1228
    %1896 = vmatpush1.bf16.msra.mxu0 %v1227
    %1897 = vmatprep.subr.bf16.mxu0 %v1232
    %1898 = vmatpush1.bf16.msra.mxu0 %v1231
    %1899 = vmatprep.subr.bf16.mxu0 %v1236
    %1900 = vmatpush1.bf16.msra.mxu0 %v1235
    %1901 = vmatprep.subr.bf16.mxu0 %v1240
    %1902 = vmatpush1.bf16.msra.mxu0 %v1239
    %1903 = vmatprep.subr.bf16.mxu0 %v1244
    %1904 = vmatpush1.bf16.msra.mxu0 %v1243
    %1905 = vmatprep.subr.bf16.mxu0 %v1248
    %1906 = vmatpush1.bf16.msra.mxu0 %v1247
    %1907 = vmatprep.subr.bf16.mxu0 %v1252
    %1908 = vmatpush1.bf16.msra.mxu0 %v1251
    %1909 = vmatprep.subr.bf16.mxu0 %v1256
    %1910 = vmatpush1.bf16.msra.mxu0 %v1255
    %1911 = vmatprep.subr.bf16.mxu0 %v1260
    %1912 = vmatpush1.bf16.msra.mxu0 %v1259
    %1913 = vmatprep.subr.bf16.mxu0 %v1264
    %1914 = vmatpush1.bf16.msra.mxu0 %v1263
    %1915 = vmatprep.subr.bf16.mxu0 %v1268
    %1916 = vmatpush1.bf16.msra.mxu0 %v1267
    %1917 = vmatprep.subr.bf16.mxu0 %v1272
    %1918 = vmatpush1.bf16.msra.mxu0 %v1271
    %1919 = vmatprep.subr.bf16.mxu0 %v1276
    %1920 = vmatpush1.bf16.msra.mxu0 %v1275
    %1921 = vmatprep.mubr.bf16.mxu0 %v425
    %1922 = vmatmul.mubr.bf16.gmra.mrb[0].mxu0 %v411
    %v1923 = vpop.f32.mrb[0].mxu0
    %v1924 = vadd.f32 %v378, %v1923
    %v1925 = vpop.f32.mrb[0].mxu0
    %v1926 = vadd.f32 %v382, %v1925
    %v1927 = vpop.f32.mrb[0].mxu0
    %v1928 = vpop.f32.mrb[0].mxu0
    %1929 = vdwg.mxu0
    %1930 = vmatprep.subr.bf16.mxu0 %v1280
    %1931 = vmatpush1.bf16.msra.mxu0 %v1279
    %1932 = vmatprep.subr.bf16.mxu0 %v1284
    %1933 = vmatpush1.bf16.msra.mxu0 %v1283
    %1934 = vmatprep.subr.bf16.mxu0 %v1288
    %1935 = vmatpush1.bf16.msra.mxu0 %v1287
    %1936 = vmatprep.subr.bf16.mxu0 %v1292
    %1937 = vmatpush1.bf16.msra.mxu0 %v1291
    %1938 = vmatprep.subr.bf16.mxu0 %v1296
    %1939 = vmatpush1.bf16.msra.mxu0 %v1295
    %1940 = vmatprep.subr.bf16.mxu0 %v1300
    %1941 = vmatpush1.bf16.msra.mxu0 %v1299
    %1942 = vmatprep.subr.bf16.mxu0 %v1304
    %1943 = vmatpush1.bf16.msra.mxu0 %v1303
    %1944 = vmatprep.subr.bf16.mxu0 %v1308
    %1945 = vmatpush1.bf16.msra.mxu0 %v1307
    %1946 = vmatprep.subr.bf16.mxu0 %v1312
    %1947 = vmatpush1.bf16.msra.mxu0 %v1311
    %1948 = vmatprep.subr.bf16.mxu0 %v1316
    %1949 = vmatpush1.bf16.msra.mxu0 %v1315
    %1950 = vmatprep.subr.bf16.mxu0 %v1320
    %1951 = vmatpush1.bf16.msra.mxu0 %v1319
    %1952 = vmatprep.subr.bf16.mxu0 %v1324
    %1953 = vmatpush1.bf16.msra.mxu0 %v1323
    %1954 = vmatprep.subr.bf16.mxu0 %v1328
    %1955 = vmatpush1.bf16.msra.mxu0 %v1327
    %1956 = vmatprep.subr.bf16.mxu0 %v1332
    %1957 = vmatpush1.bf16.msra.mxu0 %v1331
    %1958 = vmatprep.subr.bf16.mxu0 %v1336
    %1959 = vmatpush1.bf16.msra.mxu0 %v1335
    %1960 = vmatprep.subr.bf16.mxu0 %v1340
    %1961 = vmatpush1.bf16.msra.mxu0 %v1339
    %1962 = vmatprep.mubr.bf16.mxu0 %v435
    %1963 = vmatmul.mubr.bf16.gmra.mrb[0].mxu0 %v433
    %v1964 = vpop.f32.mrb[0].mxu0
    %v1965 = vadd.f32 %v1924, %v1964
    %v1966 = vpop.f32.mrb[0].mxu0
    %v1967 = vadd.f32 %v1926, %v1966
    %v1968 = vpop.f32.mrb[0].mxu0
    %v1969 = vpop.f32.mrb[0].mxu0
    %1970 = vdwg.mxu0
    %1971 = vmatprep.subr.bf16.mxu0 %v1344
    %1972 = vmatpush1.bf16.msra.mxu0 %v1343
    %1973 = vmatprep.subr.bf16.mxu0 %v1348
    %1974 = vmatpush1.bf16.msra.mxu0 %v1347
    %1975 = vmatprep.subr.bf16.mxu0 %v1352
    %1976 = vmatpush1.bf16.msra.mxu0 %v1351
    %1977 = vmatprep.subr.bf16.mxu0 %v1356
    %1978 = vmatpush1.bf16.msra.mxu0 %v1355
    %1979 = vmatprep.subr.bf16.mxu0 %v1360
    %1980 = vmatpush1.bf16.msra.mxu0 %v1359
    %1981 = vmatprep.subr.bf16.mxu0 %v1364
    %1982 = vmatpush1.bf16.msra.mxu0 %v1363
    %1983 = vmatprep.subr.bf16.mxu0 %v1368
    %1984 = vmatpush1.bf16.msra.mxu0 %v1367
    %1985 = vmatprep.subr.bf16.mxu0 %v1372
    %1986 = vmatpush1.bf16.msra.mxu0 %v1371
    %1987 = vmatprep.subr.bf16.mxu0 %v1376
    %1988 = vmatpush1.bf16.msra.mxu0 %v1375
    %1989 = vmatprep.subr.bf16.mxu0 %v1380
    %1990 = vmatpush1.bf16.msra.mxu0 %v1379
    %1991 = vmatprep.subr.bf16.mxu0 %v1384
    %1992 = vmatpush1.bf16.msra.mxu0 %v1383
    %1993 = vmatprep.subr.bf16.mxu0 %v1388
    %1994 = vmatpush1.bf16.msra.mxu0 %v1387
    %1995 = vmatprep.subr.bf16.mxu0 %v1392
    %1996 = vmatpush1.bf16.msra.mxu0 %v1391
    %1997 = vmatprep.subr.bf16.mxu0 %v1396
    %1998 = vmatpush1.bf16.msra.mxu0 %v1395
    %1999 = vmatprep.subr.bf16.mxu0 %v1400
    %2000 = vmatpush1.bf16.msra.mxu0 %v1399
    %2001 = vmatprep.subr.bf16.mxu0 %v1404
    %2002 = vmatpush1.bf16.msra.mxu0 %v1403
    %2003 = vmatprep.mubr.bf16.mxu0 %v432
    %2004 = vmatmul.mubr.bf16.gmra.mrb[0].mxu0 %v418
    %v2005 = vpop.f32.mrb[0].mxu0
    %v2006 = vadd.f32 %v1965, %v2005
    %v2007 = vpop.f32.mrb[0].mxu0
    %v2008 = vadd.f32 %v1967, %v2007
    %v2009 = vpop.f32.mrb[0].mxu0
    %v2010 = vpop.f32.mrb[0].mxu0
    %2011 = vdwg.mxu0
    %2012 = vmatprep.subr.bf16.mxu0 %v1408
    %2013 = vmatpush1.bf16.msra.mxu0 %v1407
    %2014 = vmatprep.subr.bf16.mxu0 %v1412
    %2015 = vmatpush1.bf16.msra.mxu0 %v1411
    %2016 = vmatprep.subr.bf16.mxu0 %v1416
    %2017 = vmatpush1.bf16.msra.mxu0 %v1415
    %2018 = vmatprep.subr.bf16.mxu0 %v1420
    %2019 = vmatpush1.bf16.msra.mxu0 %v1419
    %2020 = vmatprep.subr.bf16.mxu0 %v1424
    %2021 = vmatpush1.bf16.msra.mxu0 %v1423
    %2022 = vmatprep.subr.bf16.mxu0 %v1428
    %2023 = vmatpush1.bf16.msra.mxu0 %v1427
    %2024 = vmatprep.subr.bf16.mxu0 %v1432
    %2025 = vmatpush1.bf16.msra.mxu0 %v1431
    %2026 = vmatprep.subr.bf16.mxu0 %v1436
    %2027 = vmatpush1.bf16.msra.mxu0 %v1435
    %2028 = vmatprep.subr.bf16.mxu0 %v1440
    %2029 = vmatpush1.bf16.msra.mxu0 %v1439
    %2030 = vmatprep.subr.bf16.mxu0 %v1444
    %2031 = vmatpush1.bf16.msra.mxu0 %v1443
    %2032 = vmatprep.subr.bf16.mxu0 %v1448
    %2033 = vmatpush1.bf16.msra.mxu0 %v1447
    %2034 = vmatprep.subr.bf16.mxu0 %v1452
    %2035 = vmatpush1.bf16.msra.mxu0 %v1451
    %2036 = vmatprep.subr.bf16.mxu0 %v1456
    %2037 = vmatpush1.bf16.msra.mxu0 %v1455
    %2038 = vmatprep.subr.bf16.mxu0 %v1460
    %2039 = vmatpush1.bf16.msra.mxu0 %v1459
    %2040 = vmatprep.subr.bf16.mxu0 %v1464
    %2041 = vmatpush1.bf16.msra.mxu0 %v1463
    %2042 = vmatprep.subr.bf16.mxu0 %v1468
    %2043 = vmatpush1.bf16.msra.mxu0 %v1467
    %2044 = vmatprep.mubr.bf16.mxu0 %v436
    %2045 = vmatmul.mubr.bf16.gmra.mrb[0].mxu0 %v434
    %v2046 = vpop.f32.mrb[0].mxu0
    %v2047 = vadd.f32 %v2006, %v2046
    %v2048 = vpop.f32.mrb[0].mxu0
    %v2049 = vadd.f32 %v2008, %v2048
    %v2050 = vpop.f32.mrb[0].mxu0
    %v2051 = vpop.f32.mrb[0].mxu0
    %2052 = vdwg.mxu0
    %v2053 = vmax.f32 %v1883, 0.0
    %v2054 = vmax.f32 %v1885, 0.0
    %v2055 = vmax.f32 %v2047, 0.0
    %v2056 = vmax.f32 %v2049, 0.0
    %v2057 = vpack.c.bf16 %v2053, %v2053
    %v2058 = vpack.c.bf16 %v2054, %v2054
    %v2059 = vpack.c.bf16 %v2055, %v2055
    %v2060 = vpack.c.bf16 %v2056, %v2056
    %v2061 = vld [vmem:[%s6 + $0x4] sm:$0x3]
    %v2062 = vld [vmem:[#allocation7] sm:$0xff]
    %v2063 = vld [vmem:[#allocation7 + $0x8] sm:$0xff]
    %v2064 = vld [vmem:[#allocation7 + $0x10] sm:$0xff]
    %v2065 = vld [vmem:[#allocation7 + $0x18] sm:$0xff]
    %v2066 = vld [vmem:[#allocation7 + $0x20] sm:$0xff]
    %v2067 = vld [vmem:[#allocation7 + $0x28] sm:$0xff]
    %v2068 = vld [vmem:[#allocation7 + $0x30] sm:$0xff]
    %v2069 = vld [vmem:[#allocation7 + $0x38] sm:$0xff]
    %v2070 = vld [vmem:[#allocation7 + $0x40] sm:$0xff]
    %v2071 = vld [vmem:[#allocation7 + $0x48] sm:$0xff]
    %v2072 = vld [vmem:[#allocation7 + $0x50] sm:$0xff]
    %v2073 = vld [vmem:[#allocation7 + $0x58] sm:$0xff]
    %v2074 = vld [vmem:[#allocation7 + $0x60] sm:$0xff]
    %v2075 = vld [vmem:[#allocation7 + $0x68] sm:$0xff]
    %v2076 = vld [vmem:[#allocation7 + $0x70] sm:$0xff]
    %v2077 = vld [vmem:[#allocation7 + $0x78] sm:$0xff]
    %v2078 = vld [vmem:[#allocation7 + $0x80] sm:$0xff]
    %v2079 = vld [vmem:[#allocation7 + $0x88] sm:$0xff]
    %v2080 = vld [vmem:[#allocation7 + $0x90] sm:$0xff]
    %v2081 = vld [vmem:[#allocation7 + $0x98] sm:$0xff]
    %v2082 = vld [vmem:[#allocation7 + $0xa0] sm:$0xff]
    %v2083 = vld [vmem:[#allocation7 + $0xa8] sm:$0xff]
    %v2084 = vld [vmem:[#allocation7 + $0xb0] sm:$0xff]
    %v2085 = vld [vmem:[#allocation7 + $0xb8] sm:$0xff]
    %v2086 = vld [vmem:[#allocation7 + $0xc0] sm:$0xff]
    %v2087 = vld [vmem:[#allocation7 + $0xc8] sm:$0xff]
    %v2088 = vld [vmem:[#allocation7 + $0xd0] sm:$0xff]
    %v2089 = vld [vmem:[#allocation7 + $0xd8] sm:$0xff]
    %v2090 = vld [vmem:[#allocation7 + $0xe0] sm:$0xff]
    %v2091 = vld [vmem:[#allocation7 + $0xe8] sm:$0xff]
    %v2092 = vld [vmem:[#allocation7 + $0xf0] sm:$0xff]
    %v2093 = vld [vmem:[#allocation7 + $0xf8] sm:$0xff]
    %v2094 = vld [vmem:[#allocation7 + $0x100] sm:$0xff]
    %v2095 = vld [vmem:[#allocation7 + $0x108] sm:$0xff]
    %v2096 = vld [vmem:[#allocation7 + $0x110] sm:$0xff]
    %v2097 = vld [vmem:[#allocation7 + $0x118] sm:$0xff]
    %v2098 = vld [vmem:[#allocation7 + $0x120] sm:$0xff]
    %v2099 = vld [vmem:[#allocation7 + $0x128] sm:$0xff]
    %v2100 = vld [vmem:[#allocation7 + $0x130] sm:$0xff]
    %v2101 = vld [vmem:[#allocation7 + $0x138] sm:$0xff]
    %v2102 = vld [vmem:[#allocation7 + $0x140] sm:$0xff]
    %v2103 = vld [vmem:[#allocation7 + $0x148] sm:$0xff]
    %v2104 = vld [vmem:[#allocation7 + $0x150] sm:$0xff]
    %v2105 = vld [vmem:[#allocation7 + $0x158] sm:$0xff]
    %v2106 = vld [vmem:[#allocation7 + $0x160] sm:$0xff]
    %v2107 = vld [vmem:[#allocation7 + $0x168] sm:$0xff]
    %v2108 = vld [vmem:[#allocation7 + $0x170] sm:$0xff]
    %v2109 = vld [vmem:[#allocation7 + $0x178] sm:$0xff]
    %v2110 = vld [vmem:[#allocation7 + $0x180] sm:$0xff]
    %v2111 = vld [vmem:[#allocation7 + $0x188] sm:$0xff]
    %v2112 = vld [vmem:[#allocation7 + $0x190] sm:$0xff]
    %v2113 = vld [vmem:[#allocation7 + $0x198] sm:$0xff]
    %v2114 = vld [vmem:[#allocation7 + $0x1a0] sm:$0xff]
    %v2115 = vld [vmem:[#allocation7 + $0x1a8] sm:$0xff]
    %v2116 = vld [vmem:[#allocation7 + $0x1b0] sm:$0xff]
    %v2117 = vld [vmem:[#allocation7 + $0x1b8] sm:$0xff]
    %v2118 = vld [vmem:[#allocation7 + $0x1c0] sm:$0xff]
    %v2119 = vld [vmem:[#allocation7 + $0x1c8] sm:$0xff]
    %v2120 = vld [vmem:[#allocation7 + $0x1d0] sm:$0xff]
    %v2121 = vld [vmem:[#allocation7 + $0x1d8] sm:$0xff]
    %v2122 = vld [vmem:[#allocation7 + $0x1e0] sm:$0xff]
    %v2123 = vld [vmem:[#allocation7 + $0x1e8] sm:$0xff]
    %v2124 = vld [vmem:[#allocation7 + $0x1f0] sm:$0xff]
    %v2125 = vld [vmem:[#allocation7 + $0x1f8] sm:$0xff]
    %v2127 = vlaneseq
    %v2128 = vshrl.u32 %v2127, 7
    %v2129 = vsub.s32 0, %v2128
    %v2130 = vrot.slane %v2061, %v2129
    %v2131 = vlaneseq
    %v2132 = vshrl.u32 %v2131, 7
    %v2133 = vsub.s32 1, %v2132
    %v2134 = vrot.slane %v2061, %v2133
    %v2201 = vunpack.c.l.b16 %v2062
    %v2202 = vunpack.c.h.b16 %v2062
    %v2203 = vunpack.c.l.b16 %v2063
    %v2204 = vunpack.c.h.b16 %v2063
    %v2205 = vunpack.c.l.b16 %v2064
    %v2206 = vunpack.c.h.b16 %v2064
    %v2207 = vunpack.c.l.b16 %v2065
    %v2208 = vunpack.c.h.b16 %v2065
    %v2209 = vunpack.c.l.b16 %v2066
    %v2210 = vunpack.c.h.b16 %v2066
    %v2211 = vunpack.c.l.b16 %v2067
    %v2212 = vunpack.c.h.b16 %v2067
    %v2213 = vunpack.c.l.b16 %v2068
    %v2214 = vunpack.c.h.b16 %v2068
    %v2215 = vunpack.c.l.b16 %v2069
    %v2216 = vunpack.c.h.b16 %v2069
    %v2217 = vunpack.c.l.b16 %v2070
    %v2218 = vunpack.c.h.b16 %v2070
    %v2219 = vunpack.c.l.b16 %v2071
    %v2220 = vunpack.c.h.b16 %v2071
    %v2221 = vunpack.c.l.b16 %v2072
    %v2222 = vunpack.c.h.b16 %v2072
    %v2223 = vunpack.c.l.b16 %v2073
    %v2224 = vunpack.c.h.b16 %v2073
    %v2225 = vunpack.c.l.b16 %v2074
    %v2226 = vunpack.c.h.b16 %v2074
    %v2227 = vunpack.c.l.b16 %v2075
    %v2228 = vunpack.c.h.b16 %v2075
    %v2229 = vunpack.c.l.b16 %v2076
    %v2230 = vunpack.c.h.b16 %v2076
    %v2231 = vunpack.c.l.b16 %v2077
    %v2232 = vunpack.c.h.b16 %v2077
    %v2233 = vunpack.c.l.b16 %v2078
    %v2234 = vunpack.c.h.b16 %v2078
    %v2235 = vunpack.c.l.b16 %v2079
    %v2236 = vunpack.c.h.b16 %v2079
    %v2237 = vunpack.c.l.b16 %v2080
    %v2238 = vunpack.c.h.b16 %v2080
    %v2239 = vunpack.c.l.b16 %v2081
    %v2240 = vunpack.c.h.b16 %v2081
    %v2241 = vunpack.c.l.b16 %v2082
    %v2242 = vunpack.c.h.b16 %v2082
    %v2243 = vunpack.c.l.b16 %v2083
    %v2244 = vunpack.c.h.b16 %v2083
    %v2245 = vunpack.c.l.b16 %v2084
    %v2246 = vunpack.c.h.b16 %v2084
    %v2247 = vunpack.c.l.b16 %v2085
    %v2248 = vunpack.c.h.b16 %v2085
    %v2249 = vunpack.c.l.b16 %v2086
    %v2250 = vunpack.c.h.b16 %v2086
    %v2251 = vunpack.c.l.b16 %v2087
    %v2252 = vunpack.c.h.b16 %v2087
    %v2253 = vunpack.c.l.b16 %v2088
    %v2254 = vunpack.c.h.b16 %v2088
    %v2255 = vunpack.c.l.b16 %v2089
    %v2256 = vunpack.c.h.b16 %v2089
    %v2257 = vunpack.c.l.b16 %v2090
    %v2258 = vunpack.c.h.b16 %v2090
    %v2259 = vunpack.c.l.b16 %v2091
    %v2260 = vunpack.c.h.b16 %v2091
    %v2261 = vunpack.c.l.b16 %v2092
    %v2262 = vunpack.c.h.b16 %v2092
    %v2263 = vunpack.c.l.b16 %v2093
    %v2264 = vunpack.c.h.b16 %v2093
    %v2265 = vunpack.c.l.b16 %v2094
    %v2266 = vunpack.c.h.b16 %v2094
    %v2267 = vunpack.c.l.b16 %v2095
    %v2268 = vunpack.c.h.b16 %v2095
    %v2269 = vunpack.c.l.b16 %v2096
    %v2270 = vunpack.c.h.b16 %v2096
    %v2271 = vunpack.c.l.b16 %v2097
    %v2272 = vunpack.c.h.b16 %v2097
    %v2273 = vunpack.c.l.b16 %v2098
    %v2274 = vunpack.c.h.b16 %v2098
    %v2275 = vunpack.c.l.b16 %v2099
    %v2276 = vunpack.c.h.b16 %v2099
    %v2277 = vunpack.c.l.b16 %v2100
    %v2278 = vunpack.c.h.b16 %v2100
    %v2279 = vunpack.c.l.b16 %v2101
    %v2280 = vunpack.c.h.b16 %v2101
    %v2281 = vunpack.c.l.b16 %v2102
    %v2282 = vunpack.c.h.b16 %v2102
    %v2283 = vunpack.c.l.b16 %v2103
    %v2284 = vunpack.c.h.b16 %v2103
    %v2285 = vunpack.c.l.b16 %v2104
    %v2286 = vunpack.c.h.b16 %v2104
    %v2287 = vunpack.c.l.b16 %v2105
    %v2288 = vunpack.c.h.b16 %v2105
    %v2289 = vunpack.c.l.b16 %v2106
    %v2290 = vunpack.c.h.b16 %v2106
    %v2291 = vunpack.c.l.b16 %v2107
    %v2292 = vunpack.c.h.b16 %v2107
    %v2293 = vunpack.c.l.b16 %v2108
    %v2294 = vunpack.c.h.b16 %v2108
    %v2295 = vunpack.c.l.b16 %v2109
    %v2296 = vunpack.c.h.b16 %v2109
    %v2297 = vunpack.c.l.b16 %v2110
    %v2298 = vunpack.c.h.b16 %v2110
    %v2299 = vunpack.c.l.b16 %v2111
    %v2300 = vunpack.c.h.b16 %v2111
    %v2301 = vunpack.c.l.b16 %v2112
    %v2302 = vunpack.c.h.b16 %v2112
    %v2303 = vunpack.c.l.b16 %v2113
    %v2304 = vunpack.c.h.b16 %v2113
    %v2305 = vunpack.c.l.b16 %v2114
    %v2306 = vunpack.c.h.b16 %v2114
    %v2307 = vunpack.c.l.b16 %v2115
    %v2308 = vunpack.c.h.b16 %v2115
    %v2309 = vunpack.c.l.b16 %v2116
    %v2310 = vunpack.c.h.b16 %v2116
    %v2311 = vunpack.c.l.b16 %v2117
    %v2312 = vunpack.c.h.b16 %v2117
    %v2313 = vunpack.c.l.b16 %v2118
    %v2314 = vunpack.c.h.b16 %v2118
    %v2315 = vunpack.c.l.b16 %v2119
    %v2316 = vunpack.c.h.b16 %v2119
    %v2317 = vunpack.c.l.b16 %v2120
    %v2318 = vunpack.c.h.b16 %v2120
    %v2319 = vunpack.c.l.b16 %v2121
    %v2320 = vunpack.c.h.b16 %v2121
    %v2321 = vunpack.c.l.b16 %v2122
    %v2322 = vunpack.c.h.b16 %v2122
    %v2323 = vunpack.c.l.b16 %v2123
    %v2324 = vunpack.c.h.b16 %v2123
    %v2325 = vunpack.c.l.b16 %v2124
    %v2326 = vunpack.c.h.b16 %v2124
    %v2327 = vunpack.c.l.b16 %v2125
    %v2328 = vunpack.c.h.b16 %v2125
    %v2329 = vpack.c.b16 %v2203, %v2201
    %v2330 = vpack.c.b16 %v2204, %v2202
    %v2331 = vpack.c.b16 %v2207, %v2205
    %v2332 = vpack.c.b16 %v2208, %v2206
    %v2333 = vpack.c.b16 %v2211, %v2209
    %v2334 = vpack.c.b16 %v2212, %v2210
    %v2335 = vpack.c.b16 %v2215, %v2213
    %v2336 = vpack.c.b16 %v2216, %v2214
    %v2337 = vpack.c.b16 %v2219, %v2217
    %v2338 = vpack.c.b16 %v2220, %v2218
    %v2339 = vpack.c.b16 %v2223, %v2221
    %v2340 = vpack.c.b16 %v2224, %v2222
    %v2341 = vpack.c.b16 %v2227, %v2225
    %v2342 = vpack.c.b16 %v2228, %v2226
    %v2343 = vpack.c.b16 %v2231, %v2229
    %v2344 = vpack.c.b16 %v2232, %v2230
    %v2345 = vpack.c.b16 %v2235, %v2233
    %v2346 = vpack.c.b16 %v2236, %v2234
    %v2347 = vpack.c.b16 %v2239, %v2237
    %v2348 = vpack.c.b16 %v2240, %v2238
    %v2349 = vpack.c.b16 %v2243, %v2241
    %v2350 = vpack.c.b16 %v2244, %v2242
    %v2351 = vpack.c.b16 %v2247, %v2245
    %v2352 = vpack.c.b16 %v2248, %v2246
    %v2353 = vpack.c.b16 %v2251, %v2249
    %v2354 = vpack.c.b16 %v2252, %v2250
    %v2355 = vpack.c.b16 %v2255, %v2253
    %v2356 = vpack.c.b16 %v2256, %v2254
    %v2357 = vpack.c.b16 %v2259, %v2257
    %v2358 = vpack.c.b16 %v2260, %v2258
    %v2359 = vpack.c.b16 %v2263, %v2261
    %v2360 = vpack.c.b16 %v2264, %v2262
    %v2361 = vpack.c.b16 %v2267, %v2265
    %v2362 = vpack.c.b16 %v2268, %v2266
    %v2363 = vpack.c.b16 %v2271, %v2269
    %v2364 = vpack.c.b16 %v2272, %v2270
    %v2365 = vpack.c.b16 %v2275, %v2273
    %v2366 = vpack.c.b16 %v2276, %v2274
    %v2367 = vpack.c.b16 %v2279, %v2277
    %v2368 = vpack.c.b16 %v2280, %v2278
    %v2369 = vpack.c.b16 %v2283, %v2281
    %v2370 = vpack.c.b16 %v2284, %v2282
    %v2371 = vpack.c.b16 %v2287, %v2285
    %v2372 = vpack.c.b16 %v2288, %v2286
    %v2373 = vpack.c.b16 %v2291, %v2289
    %v2374 = vpack.c.b16 %v2292, %v2290
    %v2375 = vpack.c.b16 %v2295, %v2293
    %v2376 = vpack.c.b16 %v2296, %v2294
    %v2377 = vpack.c.b16 %v2299, %v2297
    %v2378 = vpack.c.b16 %v2300, %v2298
    %v2379 = vpack.c.b16 %v2303, %v2301
    %v2380 = vpack.c.b16 %v2304, %v2302
    %v2381 = vpack.c.b16 %v2307, %v2305
    %v2382 = vpack.c.b16 %v2308, %v2306
    %v2383 = vpack.c.b16 %v2311, %v2309
    %v2384 = vpack.c.b16 %v2312, %v2310
    %v2385 = vpack.c.b16 %v2315, %v2313
    %v2386 = vpack.c.b16 %v2316, %v2314
    %v2387 = vpack.c.b16 %v2319, %v2317
    %v2388 = vpack.c.b16 %v2320, %v2318
    %v2389 = vpack.c.b16 %v2323, %v2321
    %v2390 = vpack.c.b16 %v2324, %v2322
    %v2391 = vpack.c.b16 %v2327, %v2325
    %v2392 = vpack.c.b16 %v2328, %v2326
    %2457 = vmatprep.subr.bf16.mxu0 %v2330
    %2458 = vmatpush1.bf16.msra.mxu0 %v2329
    %2459 = vmatprep.subr.bf16.mxu0 %v2332
    %2460 = vmatpush1.bf16.msra.mxu0 %v2331
    %2461 = vmatprep.subr.bf16.mxu0 %v2334
    %2462 = vmatpush1.bf16.msra.mxu0 %v2333
    %2463 = vmatprep.subr.bf16.mxu0 %v2336
    %2464 = vmatpush1.bf16.msra.mxu0 %v2335
    %2465 = vmatprep.subr.bf16.mxu0 %v2338
    %2466 = vmatpush1.bf16.msra.mxu0 %v2337
    %2467 = vmatprep.subr.bf16.mxu0 %v2340
    %2468 = vmatpush1.bf16.msra.mxu0 %v2339
    %2469 = vmatprep.subr.bf16.mxu0 %v2342
    %2470 = vmatpush1.bf16.msra.mxu0 %v2341
    %2471 = vmatprep.subr.bf16.mxu0 %v2344
    %2472 = vmatpush1.bf16.msra.mxu0 %v2343
    %2473 = vmatprep.subr.bf16.mxu0 %v2346
    %2474 = vmatpush1.bf16.msra.mxu0 %v2345
    %2475 = vmatprep.subr.bf16.mxu0 %v2348
    %2476 = vmatpush1.bf16.msra.mxu0 %v2347
    %2477 = vmatprep.subr.bf16.mxu0 %v2350
    %2478 = vmatpush1.bf16.msra.mxu0 %v2349
    %2479 = vmatprep.subr.bf16.mxu0 %v2352
    %2480 = vmatpush1.bf16.msra.mxu0 %v2351
    %2481 = vmatprep.subr.bf16.mxu0 %v2354
    %2482 = vmatpush1.bf16.msra.mxu0 %v2353
    %2483 = vmatprep.subr.bf16.mxu0 %v2356
    %2484 = vmatpush1.bf16.msra.mxu0 %v2355
    %2485 = vmatprep.subr.bf16.mxu0 %v2358
    %2486 = vmatpush1.bf16.msra.mxu0 %v2357
    %2487 = vmatprep.subr.bf16.mxu0 %v2360
    %2488 = vmatpush1.bf16.msra.mxu0 %v2359
    %2489 = vmatprep.mubr.bf16.mxu0 %v2058
    %2490 = vmatmul.mubr.bf16.gmra.mrb[0].mxu0 %v2057
    %v2491 = vpop.f32.mrb[0].mxu0
    %v2492 = vadd.f32 %v2130, %v2491
    %v2493 = vpop.f32.mrb[0].mxu0
    %v2494 = vadd.f32 %v2134, %v2493
    %v2495 = vpop.f32.mrb[0].mxu0
    %v2496 = vpop.f32.mrb[0].mxu0
    %2497 = vdwg.mxu0
    %2498 = vmatprep.subr.bf16.mxu0 %v2362
    %2499 = vmatpush1.bf16.msra.mxu0 %v2361
    %2500 = vmatprep.subr.bf16.mxu0 %v2364
    %2501 = vmatpush1.bf16.msra.mxu0 %v2363
    %2502 = vmatprep.subr.bf16.mxu0 %v2366
    %2503 = vmatpush1.bf16.msra.mxu0 %v2365
    %2504 = vmatprep.subr.bf16.mxu0 %v2368
    %2505 = vmatpush1.bf16.msra.mxu0 %v2367
    %2506 = vmatprep.subr.bf16.mxu0 %v2370
    %2507 = vmatpush1.bf16.msra.mxu0 %v2369
    %2508 = vmatprep.subr.bf16.mxu0 %v2372
    %2509 = vmatpush1.bf16.msra.mxu0 %v2371
    %2510 = vmatprep.subr.bf16.mxu0 %v2374
    %2511 = vmatpush1.bf16.msra.mxu0 %v2373
    %2512 = vmatprep.subr.bf16.mxu0 %v2376
    %2513 = vmatpush1.bf16.msra.mxu0 %v2375
    %2514 = vmatprep.subr.bf16.mxu0 %v2378
    %2515 = vmatpush1.bf16.msra.mxu0 %v2377
    %2516 = vmatprep.subr.bf16.mxu0 %v2380
    %2517 = vmatpush1.bf16.msra.mxu0 %v2379
    %2518 = vmatprep.subr.bf16.mxu0 %v2382
    %2519 = vmatpush1.bf16.msra.mxu0 %v2381
    %2520 = vmatprep.subr.bf16.mxu0 %v2384
    %2521 = vmatpush1.bf16.msra.mxu0 %v2383
    %2522 = vmatprep.subr.bf16.mxu0 %v2386
    %2523 = vmatpush1.bf16.msra.mxu0 %v2385
    %2524 = vmatprep.subr.bf16.mxu0 %v2388
    %2525 = vmatpush1.bf16.msra.mxu0 %v2387
    %2526 = vmatprep.subr.bf16.mxu0 %v2390
    %2527 = vmatpush1.bf16.msra.mxu0 %v2389
    %2528 = vmatprep.subr.bf16.mxu0 %v2392
    %2529 = vmatpush1.bf16.msra.mxu0 %v2391
    %2530 = vmatprep.mubr.bf16.mxu0 %v2060
    %2531 = vmatmul.mubr.bf16.gmra.mrb[0].mxu0 %v2059
    %v2532 = vpop.f32.mrb[0].mxu0
    %v2533 = vadd.f32 %v2492, %v2532
    %v2534 = vpop.f32.mrb[0].mxu0
    %v2535 = vadd.f32 %v2494, %v2534
    %v2536 = vpop.f32.mrb[0].mxu0
    %v2537 = vpop.f32.mrb[0].mxu0
    %2538 = vdwg.mxu0
    %v2539 = vmax.f32 %v2533, 0.0
    %v2540 = vmax.f32 %v2535, 0.0
    %v2541 = vpack.c.bf16 %v2539, %v2539
    %v2542 = vpack.c.bf16 %v2540, %v2540
    %v2543 = vld [vmem:[%s6 + $0x6] sm:$0x1]
    %v2544 = vld [vmem:[#allocation8] sm:$0xf]
    %v2545 = vld [vmem:[#allocation8 + $0x4] sm:$0xf]
    %v2546 = vld [vmem:[#allocation8 + $0x8] sm:$0xf]
    %v2547 = vld [vmem:[#allocation8 + $0xc] sm:$0xf]
    %v2548 = vld [vmem:[#allocation8 + $0x10] sm:$0xf]
    %v2549 = vld [vmem:[#allocation8 + $0x14] sm:$0xf]
    %v2550 = vld [vmem:[#allocation8 + $0x18] sm:$0xf]
    %v2551 = vld [vmem:[#allocation8 + $0x1c] sm:$0xf]
    %v2552 = vld [vmem:[#allocation8 + $0x20] sm:$0xf]
    %v2553 = vld [vmem:[#allocation8 + $0x24] sm:$0xf]
    %v2554 = vld [vmem:[#allocation8 + $0x28] sm:$0xf]
    %v2555 = vld [vmem:[#allocation8 + $0x2c] sm:$0xf]
    %v2556 = vld [vmem:[#allocation8 + $0x30] sm:$0xf]
    %v2557 = vld [vmem:[#allocation8 + $0x34] sm:$0xf]
    %v2558 = vld [vmem:[#allocation8 + $0x38] sm:$0xf]
    %v2559 = vld [vmem:[#allocation8 + $0x3c] sm:$0xf]
    %v2560 = vld [vmem:[#allocation8 + $0x40] sm:$0xf]
    %v2561 = vld [vmem:[#allocation8 + $0x44] sm:$0xf]
    %v2562 = vld [vmem:[#allocation8 + $0x48] sm:$0xf]
    %v2563 = vld [vmem:[#allocation8 + $0x4c] sm:$0xf]
    %v2564 = vld [vmem:[#allocation8 + $0x50] sm:$0xf]
    %v2565 = vld [vmem:[#allocation8 + $0x54] sm:$0xf]
    %v2566 = vld [vmem:[#allocation8 + $0x58] sm:$0xf]
    %v2567 = vld [vmem:[#allocation8 + $0x5c] sm:$0xf]
    %v2568 = vld [vmem:[#allocation8 + $0x60] sm:$0xf]
    %v2569 = vld [vmem:[#allocation8 + $0x64] sm:$0xf]
    %v2570 = vld [vmem:[#allocation8 + $0x68] sm:$0xf]
    %v2571 = vld [vmem:[#allocation8 + $0x6c] sm:$0xf]
    %v2572 = vld [vmem:[#allocation8 + $0x70] sm:$0xf]
    %v2573 = vld [vmem:[#allocation8 + $0x74] sm:$0xf]
    %v2574 = vld [vmem:[#allocation8 + $0x78] sm:$0xf]
    %v2575 = vld [vmem:[#allocation8 + $0x7c] sm:$0xf]
    %v2577 = vlaneseq
    %v2578 = vshrl.u32 %v2577, 7
    %v2579 = vsub.s32 0, %v2578
    %v2580 = vrot.slane %v2543, %v2579
    %v2614 = vunpack.c.l.b16 %v2544
    %v2615 = vunpack.c.l.b16 %v2545
    %v2616 = vunpack.c.l.b16 %v2546
    %v2617 = vunpack.c.l.b16 %v2547
    %v2618 = vunpack.c.l.b16 %v2548
    %v2619 = vunpack.c.l.b16 %v2549
    %v2620 = vunpack.c.l.b16 %v2550
    %v2621 = vunpack.c.l.b16 %v2551
    %v2622 = vunpack.c.l.b16 %v2552
    %v2623 = vunpack.c.l.b16 %v2553
    %v2624 = vunpack.c.l.b16 %v2554
    %v2625 = vunpack.c.l.b16 %v2555
    %v2626 = vunpack.c.l.b16 %v2556
    %v2627 = vunpack.c.l.b16 %v2557
    %v2628 = vunpack.c.l.b16 %v2558
    %v2629 = vunpack.c.l.b16 %v2559
    %v2630 = vunpack.c.l.b16 %v2560
    %v2631 = vunpack.c.l.b16 %v2561
    %v2632 = vunpack.c.l.b16 %v2562
    %v2633 = vunpack.c.l.b16 %v2563
    %v2634 = vunpack.c.l.b16 %v2564
    %v2635 = vunpack.c.l.b16 %v2565
    %v2636 = vunpack.c.l.b16 %v2566
    %v2637 = vunpack.c.l.b16 %v2567
    %v2638 = vunpack.c.l.b16 %v2568
    %v2639 = vunpack.c.l.b16 %v2569
    %v2640 = vunpack.c.l.b16 %v2570
    %v2641 = vunpack.c.l.b16 %v2571
    %v2642 = vunpack.c.l.b16 %v2572
    %v2643 = vunpack.c.l.b16 %v2573
    %v2644 = vunpack.c.l.b16 %v2574
    %v2645 = vunpack.c.l.b16 %v2575
    %v2646 = vpack.c.b16 %v2615, %v2614
    %v2647 = vpack.c.b16 %v2617, %v2616
    %v2648 = vpack.c.b16 %v2619, %v2618
    %v2649 = vpack.c.b16 %v2621, %v2620
    %v2650 = vpack.c.b16 %v2623, %v2622
    %v2651 = vpack.c.b16 %v2625, %v2624
    %v2652 = vpack.c.b16 %v2627, %v2626
    %v2653 = vpack.c.b16 %v2629, %v2628
    %v2654 = vpack.c.b16 %v2631, %v2630
    %v2655 = vpack.c.b16 %v2633, %v2632
    %v2656 = vpack.c.b16 %v2635, %v2634
    %v2657 = vpack.c.b16 %v2637, %v2636
    %v2658 = vpack.c.b16 %v2639, %v2638
    %v2659 = vpack.c.b16 %v2641, %v2640
    %v2660 = vpack.c.b16 %v2643, %v2642
    %v2661 = vpack.c.b16 %v2645, %v2644
    %2678 = vmatprep.subr.bf16.mxu0 0
    %2679 = vmatpush1.bf16.msra.mxu0 %v2646
    %2680 = vmatprep.subr.bf16.mxu0 0
    %2681 = vmatpush1.bf16.msra.mxu0 %v2647
    %2682 = vmatprep.subr.bf16.mxu0 0
    %2683 = vmatpush1.bf16.msra.mxu0 %v2648
    %2684 = vmatprep.subr.bf16.mxu0 0
    %2685 = vmatpush1.bf16.msra.mxu0 %v2649
    %2686 = vmatprep.subr.bf16.mxu0 0
    %2687 = vmatpush1.bf16.msra.mxu0 %v2650
    %2688 = vmatprep.subr.bf16.mxu0 0
    %2689 = vmatpush1.bf16.msra.mxu0 %v2651
    %2690 = vmatprep.subr.bf16.mxu0 0
    %2691 = vmatpush1.bf16.msra.mxu0 %v2652
    %2692 = vmatprep.subr.bf16.mxu0 0
    %2693 = vmatpush1.bf16.msra.mxu0 %v2653
    %2694 = vmatprep.subr.bf16.mxu0 0
    %2695 = vmatpush1.bf16.msra.mxu0 %v2654
    %2696 = vmatprep.subr.bf16.mxu0 0
    %2697 = vmatpush1.bf16.msra.mxu0 %v2655
    %2698 = vmatprep.subr.bf16.mxu0 0
    %2699 = vmatpush1.bf16.msra.mxu0 %v2656
    %2700 = vmatprep.subr.bf16.mxu0 0
    %2701 = vmatpush1.bf16.msra.mxu0 %v2657
    %2702 = vmatprep.subr.bf16.mxu0 0
    %2703 = vmatpush1.bf16.msra.mxu0 %v2658
    %2704 = vmatprep.subr.bf16.mxu0 0
    %2705 = vmatpush1.bf16.msra.mxu0 %v2659
    %2706 = vmatprep.subr.bf16.mxu0 0
    %2707 = vmatpush1.bf16.msra.mxu0 %v2660
    %2708 = vmatprep.subr.bf16.mxu0 0
    %2709 = vmatpush1.bf16.msra.mxu0 %v2661
    %2710 = vmatprep.mubr.bf16.mxu0 %v2542
    %2711 = vmatmul.mubr.bf16.gmra.mrb[0].mxu0 %v2541
    %v2712 = vpop.f32.mrb[0].mxu0
    %v2713 = vadd.f32 %v2580, %v2712
    %v2714 = vpop.f32.mrb[0].mxu0
    %v2715 = vpop.f32.mrb[0].mxu0
    %v2716 = vpop.f32.mrb[0].mxu0
    %2717 = vdwg.mxu0
    %v2718 = vmax.f32 %v2713, 0.0
    %v2719 = vpack.c.bf16 %v2718, %v2718
    %v2720 = vld [vmem:[%s6 + $0x7] sm:$0x1]
    %v2721 = vld [vmem:[#allocation10] sm:$0xf]
    %v2722 = vld [vmem:[#allocation10 + $0x4] sm:$0xf]
    %v2723 = vld [vmem:[#allocation10 + $0x8] sm:$0xf]
    %v2724 = vld [vmem:[#allocation10 + $0xc] sm:$0xf]
    %v2725 = vld [vmem:[#allocation10 + $0x10] sm:$0xf]
    %v2726 = vld [vmem:[#allocation10 + $0x14] sm:$0xf]
    %v2727 = vld [vmem:[#allocation10 + $0x18] sm:$0xf]
    %v2728 = vld [vmem:[#allocation10 + $0x1c] sm:$0xf]
    %v2729 = vld [vmem:[#allocation10 + $0x20] sm:$0xf]
    %v2730 = vld [vmem:[#allocation10 + $0x24] sm:$0xf]
    %v2731 = vld [vmem:[#allocation10 + $0x28] sm:$0xf]
    %v2732 = vld [vmem:[#allocation10 + $0x2c] sm:$0xf]
    %v2733 = vld [vmem:[#allocation10 + $0x30] sm:$0xf]
    %v2734 = vld [vmem:[#allocation10 + $0x34] sm:$0xf]
    %v2735 = vld [vmem:[#allocation10 + $0x38] sm:$0xf]
    %v2736 = vld [vmem:[#allocation10 + $0x3c] sm:$0xf]
    %v2738 = vlaneseq
    %v2739 = vshrl.u32 %v2738, 7
    %v2740 = vsub.s32 0, %v2739
    %v2741 = vrot.slane %v2720, %v2740
    %v2759 = vunpack.c.l.b16 %v2721
    %v2760 = vunpack.c.l.b16 %v2722
    %v2761 = vunpack.c.l.b16 %v2723
    %v2762 = vunpack.c.l.b16 %v2724
    %v2763 = vunpack.c.l.b16 %v2725
    %v2764 = vunpack.c.l.b16 %v2726
    %v2765 = vunpack.c.l.b16 %v2727
    %v2766 = vunpack.c.l.b16 %v2728
    %v2767 = vunpack.c.l.b16 %v2729
    %v2768 = vunpack.c.l.b16 %v2730
    %v2769 = vunpack.c.l.b16 %v2731
    %v2770 = vunpack.c.l.b16 %v2732
    %v2771 = vunpack.c.l.b16 %v2733
    %v2772 = vunpack.c.l.b16 %v2734
    %v2773 = vunpack.c.l.b16 %v2735
    %v2774 = vunpack.c.l.b16 %v2736
    %v2775 = vpack.c.b16 %v2760, %v2759
    %v2776 = vpack.c.b16 %v2762, %v2761
    %v2777 = vpack.c.b16 %v2764, %v2763
    %v2778 = vpack.c.b16 %v2766, %v2765
    %v2779 = vpack.c.b16 %v2768, %v2767
    %v2780 = vpack.c.b16 %v2770, %v2769
    %v2781 = vpack.c.b16 %v2772, %v2771
    %v2782 = vpack.c.b16 %v2774, %v2773
    %2791 = vmatprep.subr.bf16.mxu0 0
    %2792 = vmatpush1.bf16.msra.mxu0 %v2775
    %2793 = vmatprep.subr.bf16.mxu0 0
    %2794 = vmatpush1.bf16.msra.mxu0 %v2776
    %2795 = vmatprep.subr.bf16.mxu0 0
    %2796 = vmatpush1.bf16.msra.mxu0 %v2777
    %2797 = vmatprep.subr.bf16.mxu0 0
    %2798 = vmatpush1.bf16.msra.mxu0 %v2778
    %2799 = vmatprep.subr.bf16.mxu0 0
    %2800 = vmatpush1.bf16.msra.mxu0 %v2779
    %2801 = vmatprep.subr.bf16.mxu0 0
    %2802 = vmatpush1.bf16.msra.mxu0 %v2780
    %2803 = vmatprep.subr.bf16.mxu0 0
    %2804 = vmatpush1.bf16.msra.mxu0 %v2781
    %2805 = vmatprep.subr.bf16.mxu0 0
    %2806 = vmatpush1.bf16.msra.mxu0 %v2782
    %2807 = vmatprep.subr.bf16.mxu0 0
    %2808 = vmatpush1.bf16.msra.mxu0 0
    %2809 = vmatprep.subr.bf16.mxu0 0
    %2810 = vmatpush1.bf16.msra.mxu0 0
    %2811 = vmatprep.subr.bf16.mxu0 0
    %2812 = vmatpush1.bf16.msra.mxu0 0
    %2813 = vmatprep.subr.bf16.mxu0 0
    %2814 = vmatpush1.bf16.msra.mxu0 0
    %2815 = vmatprep.subr.bf16.mxu0 0
    %2816 = vmatpush1.bf16.msra.mxu0 0
    %2817 = vmatprep.subr.bf16.mxu0 0
    %2818 = vmatpush1.bf16.msra.mxu0 0
    %2819 = vmatprep.subr.bf16.mxu0 0
    %2820 = vmatpush1.bf16.msra.mxu0 0
    %2821 = vmatprep.subr.bf16.mxu0 0
    %2822 = vmatpush1.bf16.msra.mxu0 0
    %2823 = vmatprep.mubr.bf16.mxu0 0
    %2824 = vmatmul.mubr.bf16.gmra.mrb[0].mxu0 %v2719
    %v2825 = vpop.f32.mrb[0].mxu0
    %v2826 = vadd.f32 %v2741, %v2825
    %v2827 = vpop.f32.mrb[0].mxu0
    %v2828 = vpop.f32.mrb[0].mxu0
    %v2829 = vpop.f32.mrb[0].mxu0
    %2830 = vdwg.mxu0
    %v2831 = vmax.f32 %v2826, 0.0
    %v2832 = vpack.c.bf16 %v2831, %v2831
    %v2833 = vld [vmem:[%s6 + $0x8] sm:$0x1]
    %v2834 = vld [vmem:[#allocation11] sm:$0xf]
    %v2835 = vld [vmem:[#allocation11 + $0x4] sm:$0xf]
    %v2836 = vld [vmem:[#allocation11 + $0x8] sm:$0xf]
    %v2837 = vld [vmem:[#allocation11 + $0xc] sm:$0xf]
    %v2838 = vld [vmem:[#allocation11 + $0x10] sm:$0xf]
    %v2839 = vld [vmem:[#allocation11 + $0x14] sm:$0xf]
    %v2840 = vld [vmem:[#allocation11 + $0x18] sm:$0xf]
    %v2841 = vld [vmem:[#allocation11 + $0x1c] sm:$0xf]
    %v2842 = vld [vmem:[#allocation11 + $0x20] sm:$0xf]
    %v2843 = vld [vmem:[#allocation11 + $0x24] sm:$0xf]
    %v2844 = vld [vmem:[#allocation11 + $0x28] sm:$0xf]
    %v2845 = vld [vmem:[#allocation11 + $0x2c] sm:$0xf]
    %v2846 = vld [vmem:[#allocation11 + $0x30] sm:$0xf]
    %v2847 = vld [vmem:[#allocation11 + $0x34] sm:$0xf]
    %v2848 = vld [vmem:[#allocation11 + $0x38] sm:$0xf]
    %v2849 = vld [vmem:[#allocation11 + $0x3c] sm:$0xf]
    %v2851 = vlaneseq
    %v2852 = vshrl.u32 %v2851, 7
    %v2853 = vsub.s32 0, %v2852
    %v2854 = vrot.slane %v2833, %v2853
    %v2872 = vunpack.c.l.b16 %v2834
    %v2873 = vunpack.c.l.b16 %v2835
    %v2874 = vunpack.c.l.b16 %v2836
    %v2875 = vunpack.c.l.b16 %v2837
    %v2876 = vunpack.c.l.b16 %v2838
    %v2877 = vunpack.c.l.b16 %v2839
    %v2878 = vunpack.c.l.b16 %v2840
    %v2879 = vunpack.c.l.b16 %v2841
    %v2880 = vunpack.c.l.b16 %v2842
    %v2881 = vunpack.c.l.b16 %v2843
    %v2882 = vunpack.c.l.b16 %v2844
    %v2883 = vunpack.c.l.b16 %v2845
    %v2884 = vunpack.c.l.b16 %v2846
    %v2885 = vunpack.c.l.b16 %v2847
    %v2886 = vunpack.c.l.b16 %v2848
    %v2887 = vunpack.c.l.b16 %v2849
    %v2888 = vpack.c.b16 %v2873, %v2872
    %v2889 = vpack.c.b16 %v2875, %v2874
    %v2890 = vpack.c.b16 %v2877, %v2876
    %v2891 = vpack.c.b16 %v2879, %v2878
    %v2892 = vpack.c.b16 %v2881, %v2880
    %v2893 = vpack.c.b16 %v2883, %v2882
    %v2894 = vpack.c.b16 %v2885, %v2884
    %v2895 = vpack.c.b16 %v2887, %v2886
    %2904 = vmatprep.subr.bf16.mxu0 0
    %2905 = vmatpush1.bf16.msra.mxu0 %v2888
    %2906 = vmatprep.subr.bf16.mxu0 0
    %2907 = vmatpush1.bf16.msra.mxu0 %v2889
    %2908 = vmatprep.subr.bf16.mxu0 0
    %2909 = vmatpush1.bf16.msra.mxu0 %v2890
    %2910 = vmatprep.subr.bf16.mxu0 0
    %2911 = vmatpush1.bf16.msra.mxu0 %v2891
    %2912 = vmatprep.subr.bf16.mxu0 0
    %2913 = vmatpush1.bf16.msra.mxu0 %v2892
    %2914 = vmatprep.subr.bf16.mxu0 0
    %2915 = vmatpush1.bf16.msra.mxu0 %v2893
    %2916 = vmatprep.subr.bf16.mxu0 0
    %2917 = vmatpush1.bf16.msra.mxu0 %v2894
    %2918 = vmatprep.subr.bf16.mxu0 0
    %2919 = vmatpush1.bf16.msra.mxu0 %v2895
    %2920 = vmatprep.subr.bf16.mxu0 0
    %2921 = vmatpush1.bf16.msra.mxu0 0
    %2922 = vmatprep.subr.bf16.mxu0 0
    %2923 = vmatpush1.bf16.msra.mxu0 0
    %2924 = vmatprep.subr.bf16.mxu0 0
    %2925 = vmatpush1.bf16.msra.mxu0 0
    %2926 = vmatprep.subr.bf16.mxu0 0
    %2927 = vmatpush1.bf16.msra.mxu0 0
    %2928 = vmatprep.subr.bf16.mxu0 0
    %2929 = vmatpush1.bf16.msra.mxu0 0
    %2930 = vmatprep.subr.bf16.mxu0 0
    %2931 = vmatpush1.bf16.msra.mxu0 0
    %2932 = vmatprep.subr.bf16.mxu0 0
    %2933 = vmatpush1.bf16.msra.mxu0 0
    %2934 = vmatprep.subr.bf16.mxu0 0
    %2935 = vmatpush1.bf16.msra.mxu0 0
    %2936 = vmatprep.mubr.bf16.mxu0 0
    %2937 = vmatmul.mubr.bf16.gmra.mrb[0].mxu0 %v2832
    %v2938 = vpop.f32.mrb[0].mxu0
    %v2939 = vadd.f32 %v2854, %v2938
    %v2940 = vpop.f32.mrb[0].mxu0
    %v2941 = vpop.f32.mrb[0].mxu0
    %v2942 = vpop.f32.mrb[0].mxu0
    %2943 = vdwg.mxu0
    %vm2944 = vcmask 9216
    %2945 = vst.msk [vmem:[#allocation13] sm:$0x3] %vm2944, %v2939
    // Predicated region
    $region54: #{tpu_custom_call.1} parent=1 // pred_check
      _
    $region55: #{tpu_custom_call.1} parent=1 // pred_check_branch
      %2947 = sbr.rel (0) target = $region57
    $region56: #{tpu_custom_call.1} parent=1 // pred_region
      %s2949 = ssub.s32 32, 32
      %2950 = vsyncadd [#allocation4], %s2949
      %s2952 = sshll.u32 [#allocation13], 4
      %s2953 = int_to_ptr.vmem [resolvable:$true] %s2952
      %2955 = dma.vmem_to_hbm [thread:$0]  %s2953, 32, %s7, [#allocation4]
    $region57: #{tpu_custom_call.1} parent=1 // pred_fallthru
      _
    // Predicated region
    $region58: #{tpu_custom_call.1} parent=1 // pred_check
      _
    $region59: #{tpu_custom_call.1} parent=1 // pred_check_branch
      %2957 = sbr.rel (0) target = $region61
    $region60: #{tpu_custom_call.1} parent=1 // pred_region
      %2958 = dma.done [#allocation4], 32
    $region61: #{tpu_custom_call.1} parent=1 // pred_fallthru
      _
    %2959 = vsyncpa [#allocation3], 1
    %2960 = vsyncpa [#allocation6], 1
    %2961 = vsyncpa [#allocation9], 1
    %2962 = vsyncpa [#allocation12], 1
    %2963 = vsyncpa [#allocation4], 1

</llo_original>
